<compile_context>
chip_gen: v7x
topology: tpu7x:2x2x1
jax: 0.10.0
libtpu: 0.0.40
codegen_flags: <defaults>
</compile_context>

<pallas_src>
import jax
import jax.numpy as jnp
from jax.experimental import pallas as pl
from jax.experimental.pallas import tpu as pltpu

LEAKY_SLOPE = 0.01       # PyTorch nn.LeakyReLU default negative_slope
NUM_CLASSES = 10
NUM_CLASSES_PAD = 16     # pad the label-table sublane dim for clean layout


def _round_up(x, m):
    return ((x + m - 1) // m) * m


def _generator_kernel(x_ref, lbl_ref, table_ref,
                      w1_ref,
                      w2_ref, b2_ref,
                      w3_ref, b3_ref,
                      w4_ref, b4_ref,
                      o_ref):
    """Fused 4-layer MLP: (Linear + LeakyReLU) x3, Linear + Tanh.

    bf16 MXU matmuls with f32 accumulation; elementwise math in f32 (v5e-safe),
    activations carried across layers in bf16.  Label embedding (+ b1) arrives
    pre-multiplied by w1's embedding rows in a tiny VMEM-resident table and is
    applied via an in-kernel one-hot matmul.
    """
    def leaky_relu(h):
        return jnp.where(h > 0, h, LEAKY_SLOPE * h)

    tb = lbl_ref.shape[0]
    ncls = table_ref.shape[0]

    # one-hot label encoding -> [TB, NUM_CLASSES_PAD] bf16 (exact 0/1 values)
    class_iota = jax.lax.broadcasted_iota(jnp.int32, (tb, ncls), 1)
    onehot = (class_iota == lbl_ref[...]).astype(jnp.bfloat16)

    # layer 1: x @ w1[:input_dim]  +  onehot @ (embedding @ w1[input_dim:] + b1)
    h = jnp.dot(x_ref[...], w1_ref[...], preferred_element_type=jnp.float32)
    h += jnp.dot(onehot, table_ref[...], preferred_element_type=jnp.float32)
    h = leaky_relu(h).astype(jnp.bfloat16)

    # layer 2
    h = jnp.dot(h, w2_ref[...], preferred_element_type=jnp.float32) + b2_ref[...]
    h = leaky_relu(h).astype(jnp.bfloat16)

    # layer 3
    h = jnp.dot(h, w3_ref[...], preferred_element_type=jnp.float32) + b3_ref[...]
    h = leaky_relu(h).astype(jnp.bfloat16)

    # layer 4 + tanh
    h = jnp.dot(h, w4_ref[...], preferred_element_type=jnp.float32) + b4_ref[...]
    o_ref[...] = jnp.tanh(h).astype(o_ref.dtype)


@jax.jit
def conditional_generator_forward(x, labels, params):
    """Matches ConditionalGenerator.forward(x, labels).

    x:      [B, input_dim] float32
    labels: [B] int32 in [0, 10)
    returns [B, output_dim] float32
    """
    batch, input_dim = x.shape

    # --- glue: fold embedding lookup + b1 into a tiny [16, 256] bf16 table ---
    w1 = params["w1"]                                 # [input_dim + 10, 256] bf16
    w1x = w1[:input_dim, :]                           # [input_dim, 256]      bf16
    w1e = w1[input_dim:, :].astype(jnp.float32)       # [10, 256]             f32
    table = jnp.dot(params["embedding"], w1e) + params["b1"]   # [10, 256] f32
    table = jnp.pad(table, ((0, NUM_CLASSES_PAD - NUM_CLASSES), (0, 0)))
    table = table.astype(jnp.bfloat16)                # [16, 256] bf16

    # --- activation inputs: bf16 x, 2-D int32 labels ---
    x_bf16 = x.astype(jnp.bfloat16)
    labels2d = labels.astype(jnp.int32).reshape(batch, 1)

    # --- pad layer-4 output to a lane-dense multiple of 128 ---
    out_dim = params["w4"].shape[1]
    out_pad = _round_up(out_dim, 128)
    if out_pad != out_dim:
        w4 = jnp.pad(params["w4"], ((0, 0), (0, out_pad - out_dim)))
        b4 = jnp.pad(params["b4"], ((0, 0), (0, out_pad - out_dim)))
    else:
        w4, b4 = params["w4"], params["b4"]

    # --- batch tiling: large tile to amortize per-grid-step overhead ---
    TB = min(512, _round_up(batch, 16))
    grid = (pl.cdiv(batch, TB),)

    def act_spec(dim):
        return pl.BlockSpec((TB, dim), lambda i: (i, 0))

    def const_spec(shape):
        return pl.BlockSpec(shape, lambda i: (0, 0))

    out_padded = pl.pallas_call(
        _generator_kernel,
        out_shape=jax.ShapeDtypeStruct((batch, out_pad), jnp.float32),
        grid_spec=pltpu.PrefetchScalarGridSpec(
            num_scalar_prefetch=0,
            grid=grid,
            in_specs=[
                act_spec(input_dim),                     # x tile (bf16)
                act_spec(1),                             # labels tile (int32)
                const_spec((NUM_CLASSES_PAD, 256)),      # folded label table
                const_spec((input_dim, 256)),            # w1 (input rows only)
                const_spec((256, 512)),                  # w2
                const_spec((1, 512)),                    # b2
                const_spec((512, 1024)),                 # w3
                const_spec((1, 1024)),                   # b3
                const_spec((1024, out_pad)),             # w4 (lane-padded)
                const_spec((1, out_pad)),                # b4 (lane-padded)
            ],
            out_specs=act_spec(out_pad),
        ),
        compiler_params=pltpu.CompilerParams(
            dimension_semantics=("parallel",),
            vmem_limit_bytes=32 << 20,
        ),
    )(x_bf16, labels2d, table,
      w1x,
      params["w2"], params["b2"],
      params["w3"], params["b3"],
      w4, b4)

    if out_pad != out_dim:
        out_padded = out_padded[:, :out_dim]
    return out_padded


def init_params(key, input_dim, output_dim):
    """Parameter init matching the PyTorch module's shapes.

    Weights are stored as [in, out] (transposed vs. PyTorch's [out, in]) in
    bfloat16; biases and the embedding table stay float32.
    """
    in_dim = input_dim + NUM_CLASSES  # noise dim + 10-dim label embedding
    dims = [(in_dim, 256), (256, 512), (512, 1024), (1024, output_dim)]

    keys = jax.random.split(key, 1 + 2 * len(dims))
    params = {"embedding": jax.random.normal(keys[0], (NUM_CLASSES, 10),
                                             jnp.float32)}
    for i, (din, dout) in enumerate(dims, start=1):
        bound = 1.0 / jnp.sqrt(jnp.float32(din))
        w = jax.random.uniform(keys[2 * i - 1], (din, dout), jnp.float32,
                               -bound, bound)
        b = jax.random.uniform(keys[2 * i], (1, dout), jnp.float32,
                               -bound, bound)
        params[f"w{i}"] = w.astype(jnp.bfloat16)
        params[f"b{i}"] = b
    return params


def reference_forward(x, labels, params):
    """Pure-JAX reference (f32 math on the bf16-stored weights)."""
    emb = jnp.take(params["embedding"], labels, axis=0)
    h = jnp.concatenate([x, emb], axis=1)
    for i in (1, 2, 3):
        h = h @ params[f"w{i}"].astype(jnp.float32) + params[f"b{i}"]
        h = jnp.where(h > 0, h, LEAKY_SLOPE * h)
    h = h @ params["w4"].astype(jnp.float32) + params["b4"]
    return jnp.tanh(h)


if __name__ == "__main__":
    input_dim = 32    # noise dimension
    output_dim = 64   # e.g. flattened image dim (kept small)
    batch = 2

    key = jax.random.PRNGKey(0)
    k_param, k_x, k_lbl = jax.random.split(key, 3)

    params = init_params(k_param, input_dim, output_dim)
    x = jax.random.normal(k_x, (batch, input_dim), jnp.float32)
    labels = jax.random.randint(k_lbl, (batch,), 0, NUM_CLASSES, jnp.int32)

    out = conditional_generator_forward(x, labels, params)
    out = jax.block_until_ready(out)

    ref = reference_forward(x, labels, params)
    assert out.shape == (batch, output_dim), out.shape
    # bf16 matmul operands, bf16-carried activations, f32 accumulation
    assert jnp.allclose(out, ref, atol=3e-2, rtol=3e-2), "mismatch vs reference"

    print("KERNEL_OK")
</pallas_src>

<mosaic_0001>
module attributes {stable_mosaic.version = 11 : i64} {
  func.func @_generator_kernel(%arg0: i32, %arg1: memref<16x32xbf16, #tpu.memory_space<vmem>>, %arg2: memref<16x1xi32, #tpu.memory_space<vmem>>, %arg3: memref<16x256xbf16, #tpu.memory_space<vmem>>, %arg4: memref<32x256xbf16, #tpu.memory_space<vmem>>, %arg5: memref<256x512xbf16, #tpu.memory_space<vmem>>, %arg6: memref<1x512xf32, #tpu.memory_space<vmem>>, %arg7: memref<512x1024xbf16, #tpu.memory_space<vmem>>, %arg8: memref<1x1024xf32, #tpu.memory_space<vmem>>, %arg9: memref<1024x128xbf16, #tpu.memory_space<vmem>>, %arg10: memref<1x128xf32, #tpu.memory_space<vmem>>, %arg11: memref<16x128xf32, #tpu.memory_space<vmem>>) attributes {dimension_semantics = [#tpu.dimension_semantics<parallel>], iteration_bounds = array<i64: 1>, scalar_prefetch = 0 : i64, scratch_operands = 0 : i64, tpu.core_type = #tpu.core_type<tc>, window_params = [{transform_indices = @transform_0, window_bounds = array<i64: 16, 32>}, {transform_indices = @transform_1, window_bounds = array<i64: 16, 1>}, {pipeline_mode = #tpu.pipeline_mode<synchronous>, transform_indices = @transform_2, window_bounds = array<i64: 16, 256>}, {pipeline_mode = #tpu.pipeline_mode<synchronous>, transform_indices = @transform_3, window_bounds = array<i64: 32, 256>}, {pipeline_mode = #tpu.pipeline_mode<synchronous>, transform_indices = @transform_4, window_bounds = array<i64: 256, 512>}, {pipeline_mode = #tpu.pipeline_mode<synchronous>, transform_indices = @transform_5, window_bounds = array<i64: 1, 512>}, {pipeline_mode = #tpu.pipeline_mode<synchronous>, transform_indices = @transform_6, window_bounds = array<i64: 512, 1024>}, {pipeline_mode = #tpu.pipeline_mode<synchronous>, transform_indices = @transform_7, window_bounds = array<i64: 1, 1024>}, {pipeline_mode = #tpu.pipeline_mode<synchronous>, transform_indices = @transform_8, window_bounds = array<i64: 1024, 128>}, {pipeline_mode = #tpu.pipeline_mode<synchronous>, transform_indices = @transform_9, window_bounds = array<i64: 1, 128>}, {transform_indices = @transform_10, window_bounds = array<i64: 16, 128>}]} {
    %0 = tpu.iota {dimensions = array<i32: 1>} : vector<16x16xi32>
    %c0 = arith.constant 0 : index
    %c0_0 = arith.constant 0 : index
    %1 = vector.load %arg2[%c0, %c0_0] : memref<16x1xi32, #tpu.memory_space<vmem>>, vector<16x1xi32>
    %2 = vector.broadcast %1 : vector<16x1xi32> to vector<16x16xi32>
    %3 = arith.cmpi eq, %0, %2 : vector<16x16xi32>
    %4 = arith.extui %3 : vector<16x16xi1> to vector<16x16xi32>
    %5 = arith.sitofp %4 : vector<16x16xi32> to vector<16x16xf32>
    %6 = arith.truncf %5 : vector<16x16xf32> to vector<16x16xbf16>
    %c0_1 = arith.constant 0 : index
    %c0_2 = arith.constant 0 : index
    %7 = vector.load %arg1[%c0_1, %c0_2] : memref<16x32xbf16, #tpu.memory_space<vmem>>, vector<16x32xbf16>
    %c0_3 = arith.constant 0 : index
    %c0_4 = arith.constant 0 : index
    %8 = vector.load %arg4[%c0_3, %c0_4] : memref<32x256xbf16, #tpu.memory_space<vmem>>, vector<32x256xbf16>
    %cst = arith.constant dense<0.000000e+00> : vector<16x256xf32>
    %9 = tpu.matmul %7, %8, %cst {dimension_numbers = #tpu.dot_dimension_numbers<[1], [0], [0], [1], [0, 0, 1, 1], [], []>} : vector<16x32xbf16>, vector<32x256xbf16>, vector<16x256xf32> -> vector<16x256xf32>
    %c0_5 = arith.constant 0 : index
    %c0_6 = arith.constant 0 : index
    %10 = vector.load %arg3[%c0_5, %c0_6] : memref<16x256xbf16, #tpu.memory_space<vmem>>, vector<16x256xbf16>
    %cst_7 = arith.constant dense<0.000000e+00> : vector<16x256xf32>
    %11 = tpu.matmul %6, %10, %cst_7 {dimension_numbers = #tpu.dot_dimension_numbers<[1], [0], [0], [1], [0, 0, 1, 1], [], []>} : vector<16x16xbf16>, vector<16x256xbf16>, vector<16x256xf32> -> vector<16x256xf32>
    %12 = arith.addf %9, %11 : vector<16x256xf32>
    %cst_8 = arith.constant 0.000000e+00 : f32
    %13 = vector.broadcast %cst_8 : f32 to vector<16x256xf32>
    %14 = arith.cmpf ogt, %12, %13 : vector<16x256xf32>
    %cst_9 = arith.constant 0.00999999977 : f32
    %15 = vector.broadcast %cst_9 : f32 to vector<16x256xf32>
    %16 = arith.mulf %15, %12 : vector<16x256xf32>
    %17 = arith.select %14, %12, %16 : vector<16x256xi1>, vector<16x256xf32>
    %18 = arith.truncf %17 : vector<16x256xf32> to vector<16x256xbf16>
    %c0_10 = arith.constant 0 : index
    %c0_11 = arith.constant 0 : index
    %19 = vector.load %arg5[%c0_10, %c0_11] : memref<256x512xbf16, #tpu.memory_space<vmem>>, vector<256x512xbf16>
    %cst_12 = arith.constant dense<0.000000e+00> : vector<16x512xf32>
    %20 = tpu.matmul %18, %19, %cst_12 {dimension_numbers = #tpu.dot_dimension_numbers<[1], [0], [0], [1], [0, 0, 1, 1], [], []>} : vector<16x256xbf16>, vector<256x512xbf16>, vector<16x512xf32> -> vector<16x512xf32>
    %c0_13 = arith.constant 0 : index
    %c0_14 = arith.constant 0 : index
    %21 = vector.load %arg6[%c0_13, %c0_14] : memref<1x512xf32, #tpu.memory_space<vmem>>, vector<1x512xf32>
    %22 = vector.broadcast %21 : vector<1x512xf32> to vector<16x512xf32>
    %23 = arith.addf %20, %22 : vector<16x512xf32>
    %cst_15 = arith.constant 0.000000e+00 : f32
    %24 = vector.broadcast %cst_15 : f32 to vector<16x512xf32>
    %25 = arith.cmpf ogt, %23, %24 : vector<16x512xf32>
    %cst_16 = arith.constant 0.00999999977 : f32
    %26 = vector.broadcast %cst_16 : f32 to vector<16x512xf32>
    %27 = arith.mulf %26, %23 : vector<16x512xf32>
    %28 = arith.select %25, %23, %27 : vector<16x512xi1>, vector<16x512xf32>
    %29 = arith.truncf %28 : vector<16x512xf32> to vector<16x512xbf16>
    %c0_17 = arith.constant 0 : index
    %c0_18 = arith.constant 0 : index
    %30 = vector.load %arg7[%c0_17, %c0_18] : memref<512x1024xbf16, #tpu.memory_space<vmem>>, vector<512x1024xbf16>
    %cst_19 = arith.constant dense<0.000000e+00> : vector<16x1024xf32>
    %31 = tpu.matmul %29, %30, %cst_19 {dimension_numbers = #tpu.dot_dimension_numbers<[1], [0], [0], [1], [0, 0, 1, 1], [], []>} : vector<16x512xbf16>, vector<512x1024xbf16>, vector<16x1024xf32> -> vector<16x1024xf32>
    %c0_20 = arith.constant 0 : index
    %c0_21 = arith.constant 0 : index
    %32 = vector.load %arg8[%c0_20, %c0_21] : memref<1x1024xf32, #tpu.memory_space<vmem>>, vector<1x1024xf32>
    %33 = vector.broadcast %32 : vector<1x1024xf32> to vector<16x1024xf32>
    %34 = arith.addf %31, %33 : vector<16x1024xf32>
    %cst_22 = arith.constant 0.000000e+00 : f32
    %35 = vector.broadcast %cst_22 : f32 to vector<16x1024xf32>
    %36 = arith.cmpf ogt, %34, %35 : vector<16x1024xf32>
    %cst_23 = arith.constant 0.00999999977 : f32
    %37 = vector.broadcast %cst_23 : f32 to vector<16x1024xf32>
    %38 = arith.mulf %37, %34 : vector<16x1024xf32>
    %39 = arith.select %36, %34, %38 : vector<16x1024xi1>, vector<16x1024xf32>
    %40 = arith.truncf %39 : vector<16x1024xf32> to vector<16x1024xbf16>
    %c0_24 = arith.constant 0 : index
    %c0_25 = arith.constant 0 : index
    %41 = vector.load %arg9[%c0_24, %c0_25] : memref<1024x128xbf16, #tpu.memory_space<vmem>>, vector<1024x128xbf16>
    %cst_26 = arith.constant dense<0.000000e+00> : vector<16x128xf32>
    %42 = tpu.matmul %40, %41, %cst_26 {dimension_numbers = #tpu.dot_dimension_numbers<[1], [0], [0], [1], [0, 0, 1, 1], [], []>} : vector<16x1024xbf16>, vector<1024x128xbf16>, vector<16x128xf32> -> vector<16x128xf32>
    %c0_27 = arith.constant 0 : index
    %c0_28 = arith.constant 0 : index
    %43 = vector.load %arg10[%c0_27, %c0_28] : memref<1x128xf32, #tpu.memory_space<vmem>>, vector<1x128xf32>
    %44 = vector.broadcast %43 : vector<1x128xf32> to vector<16x128xf32>
    %45 = arith.addf %42, %44 : vector<16x128xf32>
    %46 = math.tanh %45 : vector<16x128xf32>
    %c0_29 = arith.constant 0 : index
    %c0_30 = arith.constant 0 : index
    %47 = vector.load %arg11[%c0_29, %c0_30] : memref<16x128xf32, #tpu.memory_space<vmem>>, vector<16x128xf32>
    tpu.vector_store %arg11[%c0_29, %c0_30], %46 {strides = array<i32>} : memref<16x128xf32, #tpu.memory_space<vmem>>, vector<16x128xf32>,
    return
  }
  func.func @transform_0(%arg0: i32) -> (i32, i32) {
    %c0_i32 = arith.constant 0 : i32
    %c0_i32_0 = arith.constant 0 : i32
    return %arg0, %c0_i32 : i32, i32
  }
  func.func @transform_1(%arg0: i32) -> (i32, i32) {
    %c0_i32 = arith.constant 0 : i32
    %c0_i32_0 = arith.constant 0 : i32
    return %arg0, %c0_i32 : i32, i32
  }
  func.func @transform_2(%arg0: i32) -> (i32, i32) {
    %c0_i32 = arith.constant 0 : i32
    %c0_i32_0 = arith.constant 0 : i32
    %c0_i32_1 = arith.constant 0 : i32
    return %c0_i32, %c0_i32_0 : i32, i32
  }
  func.func @transform_3(%arg0: i32) -> (i32, i32) {
    %c0_i32 = arith.constant 0 : i32
    %c0_i32_0 = arith.constant 0 : i32
    %c0_i32_1 = arith.constant 0 : i32
    return %c0_i32, %c0_i32_0 : i32, i32
  }
  func.func @transform_4(%arg0: i32) -> (i32, i32) {
    %c0_i32 = arith.constant 0 : i32
    %c0_i32_0 = arith.constant 0 : i32
    %c0_i32_1 = arith.constant 0 : i32
    return %c0_i32, %c0_i32_0 : i32, i32
  }
  func.func @transform_5(%arg0: i32) -> (i32, i32) {
    %c0_i32 = arith.constant 0 : i32
    %c0_i32_0 = arith.constant 0 : i32
    %c0_i32_1 = arith.constant 0 : i32
    return %c0_i32, %c0_i32_0 : i32, i32
  }
  func.func @transform_6(%arg0: i32) -> (i32, i32) {
    %c0_i32 = arith.constant 0 : i32
    %c0_i32_0 = arith.constant 0 : i32
    %c0_i32_1 = arith.constant 0 : i32
    return %c0_i32, %c0_i32_0 : i32, i32
  }
  func.func @transform_7(%arg0: i32) -> (i32, i32) {
    %c0_i32 = arith.constant 0 : i32
    %c0_i32_0 = arith.constant 0 : i32
    %c0_i32_1 = arith.constant 0 : i32
    return %c0_i32, %c0_i32_0 : i32, i32
  }
  func.func @transform_8(%arg0: i32) -> (i32, i32) {
    %c0_i32 = arith.constant 0 : i32
    %c0_i32_0 = arith.constant 0 : i32
    %c0_i32_1 = arith.constant 0 : i32
    return %c0_i32, %c0_i32_0 : i32, i32
  }
  func.func @transform_9(%arg0: i32) -> (i32, i32) {
    %c0_i32 = arith.constant 0 : i32
    %c0_i32_0 = arith.constant 0 : i32
    %c0_i32_1 = arith.constant 0 : i32
    return %c0_i32, %c0_i32_0 : i32, i32
  }
  func.func @transform_10(%arg0: i32) -> (i32, i32) {
    %c0_i32 = arith.constant 0 : i32
    %c0_i32_0 = arith.constant 0 : i32
    return %arg0, %c0_i32 : i32, i32
  }
}

</mosaic_0001>

<llo_original>
// kernel: conditional_generator_forward.1
$region0: #{conditional_generator_forward.1}
  #allocation0 [shape = 'u32[]', space=smem, size = 0x4, offset = 0x4, fixed_abs, tag = 'smem constant byte address 0x4 - core index']
  #allocation1 [shape = 'u32[144,128]{1,0:T(1,128)}', space=vmem, size = 0x12000, scoped, tag = 'internal scratch']
  %s0 = inlined_call_operand.vmem [shape: bf16[2,32], index: 0, kind: input, shape index: {}]
  %s1 = inlined_call_operand.vmem [shape: s32[2,1], index: 1, kind: input, shape index: {}]
  %s2 = inlined_call_operand.vmem [shape: bf16[16,256], index: 2, kind: input, shape index: {}]
  %s3 = inlined_call_operand.vmem [shape: bf16[32,256], index: 3, kind: input, shape index: {}]
  %s4 = inlined_call_operand.vmem [shape: bf16[256,512], index: 4, kind: input, shape index: {}]
  %s5 = inlined_call_operand.vmem [shape: f32[1,512], index: 5, kind: input, shape index: {}]
  %s6 = inlined_call_operand.hbm [shape: bf16[512,1024], index: 6, kind: input, shape index: {}]
  %s7 = inlined_call_operand.vmem [shape: f32[1,1024], index: 7, kind: input, shape index: {}]
  %s8 = inlined_call_operand.vmem [shape: bf16[1024,128], index: 8, kind: input, shape index: {}]
  %s9 = inlined_call_operand.vmem [shape: f32[1,128], index: 9, kind: input, shape index: {}]
  %s10 = inlined_call_operand.hbm [shape: f32[2,128], index: 10, kind: output, shape index: {}]
  %s11 = sld [smem:[#allocation0]]
  $region54: #{conditional_generator_forward.1} parent=0
    _
  %s13 = ssub.s32 1, %s11
  %s14 = scalar_select 0, %s13, %s11
  $region1: #{conditional_generator_forward.1} parent=0
    #allocation2 [shape = 'u8[1048576]{0}', space=vmem, size = 0x100000, scoped, tag = 'input window, operand 6, single buffered']
    #allocation3 [shape = 's32[1]{0}', space=sflag, size = 0x4, scoped, tag = 'scoped memory for conditional_generator_forward.1']
    #allocation4 [shape = 's32[1]{0}', space=sflag, size = 0x4, scoped, tag = 'scoped memory for conditional_generator_forward.1']
    #allocation5 [shape = 'u8[8192]{0}', space=vmem, size = 0x2000, scoped, tag = 'output window, operand 0, single buffered']
    %15 = vsyncpa [#allocation3], 0
    %16 = vsyncpa [#allocation4], 0
    // Predicated region
    $region2: #{conditional_generator_forward.1} parent=1 // pred_check
      _
    $region3: #{conditional_generator_forward.1} parent=1 // pred_check_branch
      %18 = sbr.rel (0) target = $region5
    $region4: #{conditional_generator_forward.1} parent=1 // pred_region
      _
    $region5: #{conditional_generator_forward.1} parent=1 // pred_fallthru
      _
    // Predicated region
    $region6: #{conditional_generator_forward.1} parent=1 // pred_check
      _
    $region7: #{conditional_generator_forward.1} parent=1 // pred_check_branch
      %20 = sbr.rel (0) target = $region9
    $region8: #{conditional_generator_forward.1} parent=1 // pred_region
      _
    $region9: #{conditional_generator_forward.1} parent=1 // pred_fallthru
      _
    // Predicated region
    $region10: #{conditional_generator_forward.1} parent=1 // pred_check
      _
    $region11: #{conditional_generator_forward.1} parent=1 // pred_check_branch
      %22 = sbr.rel (0) target = $region13
    $region12: #{conditional_generator_forward.1} parent=1 // pred_region
      _
    $region13: #{conditional_generator_forward.1} parent=1 // pred_fallthru
      _
    // Predicated region
    $region14: #{conditional_generator_forward.1} parent=1 // pred_check
      _
    $region15: #{conditional_generator_forward.1} parent=1 // pred_check_branch
      %24 = sbr.rel (0) target = $region17
    $region16: #{conditional_generator_forward.1} parent=1 // pred_region
      _
    $region17: #{conditional_generator_forward.1} parent=1 // pred_fallthru
      _
    // Predicated region
    $region18: #{conditional_generator_forward.1} parent=1 // pred_check
      _
    $region19: #{conditional_generator_forward.1} parent=1 // pred_check_branch
      %26 = sbr.rel (0) target = $region21
    $region20: #{conditional_generator_forward.1} parent=1 // pred_region
      _
    $region21: #{conditional_generator_forward.1} parent=1 // pred_fallthru
      _
    // Predicated region
    $region22: #{conditional_generator_forward.1} parent=1 // pred_check
      _
    $region23: #{conditional_generator_forward.1} parent=1 // pred_check_branch
      %28 = sbr.rel (0) target = $region25
    $region24: #{conditional_generator_forward.1} parent=1 // pred_region
      _
    $region25: #{conditional_generator_forward.1} parent=1 // pred_fallthru
      _
    // Predicated region
    $region26: #{conditional_generator_forward.1} parent=1 // pred_check
      _
    $region27: #{conditional_generator_forward.1} parent=1 // pred_check_branch
      %30 = sbr.rel (0) target = $region29
    $region28: #{conditional_generator_forward.1} parent=1 // pred_region
      %s32 = ssub.s32 32768, 32768
      %33 = vsyncadd [#allocation3], %s32
      %s34 = sshll.u32 [#allocation2], 4
      %s35 = int_to_ptr.vmem [resolvable:$true] %s34
      %40 = dma.hbm_to_vmem [thread:$0]  %s6, 32768, %s35, [#allocation3], 512, 512, 32
    $region29: #{conditional_generator_forward.1} parent=1 // pred_fallthru
      _
    // Predicated region
    $region30: #{conditional_generator_forward.1} parent=1 // pred_check
      _
    $region31: #{conditional_generator_forward.1} parent=1 // pred_check_branch
      %42 = sbr.rel (0) target = $region33
    $region32: #{conditional_generator_forward.1} parent=1 // pred_region
      _
    $region33: #{conditional_generator_forward.1} parent=1 // pred_fallthru
      _
    // Predicated region
    $region34: #{conditional_generator_forward.1} parent=1 // pred_check
      _
    $region35: #{conditional_generator_forward.1} parent=1 // pred_check_branch
      %44 = sbr.rel (0) target = $region37
    $region36: #{conditional_generator_forward.1} parent=1 // pred_region
      _
    $region37: #{conditional_generator_forward.1} parent=1 // pred_fallthru
      _
    // Predicated region
    $region38: #{conditional_generator_forward.1} parent=1 // pred_check
      _
    $region39: #{conditional_generator_forward.1} parent=1 // pred_check_branch
      %46 = sbr.rel (0) target = $region41
    $region40: #{conditional_generator_forward.1} parent=1 // pred_region
      _
    $region41: #{conditional_generator_forward.1} parent=1 // pred_fallthru
      _
    // Predicated region
    $region42: #{conditional_generator_forward.1} parent=1 // pred_check
      _
    $region43: #{conditional_generator_forward.1} parent=1 // pred_check_branch
      %48 = sbr.rel (0) target = $region45
    $region44: #{conditional_generator_forward.1} parent=1 // pred_region
      %49 = dma.done [#allocation3], 32768
    $region45: #{conditional_generator_forward.1} parent=1 // pred_fallthru
      _
    %v51 = vlaneseq
    %v52 = vand.u32 %v51, 127
    %v53 = vld [vmem:[%s1] sm:$0xff]
    %v54 = vld [vmem:[%s1 + $0x8] sm:$0xff]
    %55 = vset.pattern.permute.xlu0 0
    %56 = vperm.xlu0 %55, %v53
    %v57 = vpop.permute.xlu0 %56
    %58 = vset.pattern.permute.xlu0 0
    %59 = vperm.xlu0 %58, %v54
    %v60 = vpop.permute.xlu0 %59
    %vm61 = vcmp.eq.s32.totalorder %v52, %v57
    %vm62 = vcmp.eq.s32.totalorder %v52, %v60
    %v63 = vsel %vm61, 1, 0
    %v64 = vsel %vm62, 1, 0
    %v65 = vcvt.s32.f32 %v63
    %v66 = vcvt.s32.f32 %v64
    %v67 = vpack.c.bf16 %v66, %v65
    %v68 = vld [vmem:[%s0] sm:$0x1]
    %v69 = vld [vmem:[%s0 + $0x1] sm:$0x1]
    %v70 = vld [vmem:[%s0 + $0x2] sm:$0x1]
    %v71 = vld [vmem:[%s0 + $0x3] sm:$0x1]
    %v72 = vld [vmem:[%s0 + $0x4] sm:$0x1]
    %v73 = vld [vmem:[%s0 + $0x5] sm:$0x1]
    %v74 = vld [vmem:[%s0 + $0x6] sm:$0x1]
    %v75 = vld [vmem:[%s0 + $0x7] sm:$0x1]
    %v76 = vld [vmem:[%s3] sm:$0xff]
    %v77 = vld [vmem:[%s3 + $0x8] sm:$0xff]
    %v78 = vld [vmem:[%s3 + $0x10] sm:$0xff]
    %v79 = vld [vmem:[%s3 + $0x18] sm:$0xff]
    %v80 = vld [vmem:[%s2] sm:$0xff]
    %v81 = vld [vmem:[%s2 + $0x8] sm:$0xff]
    %v84 = vunpack.c.l.b16 %v80
    %v85 = vunpack.c.h.b16 %v80
    %v86 = vunpack.c.l.b16 %v81
    %v87 = vunpack.c.h.b16 %v81
    %v88 = vpack.c.b16 %v86, %v84
    %v89 = vpack.c.b16 %v87, %v85
    %vm92 = vcmask 130048
    %v94 = vsel %vm92, %v67, 0
    %96 = vmatprep.subr.bf16.mxu0 %v89
    %97 = vmatpush1.bf16.msra.mxu0 %v88
    %98 = vmatprep.subr.bf16.mxu0 0
    %99 = vmatpush1.bf16.msra.mxu0 0
    %100 = vmatprep.subr.bf16.mxu0 0
    %101 = vmatpush1.bf16.msra.mxu0 0
    %102 = vmatprep.subr.bf16.mxu0 0
    %103 = vmatpush1.bf16.msra.mxu0 0
    %104 = vmatprep.subr.bf16.mxu0 0
    %105 = vmatpush1.bf16.msra.mxu0 0
    %106 = vmatprep.subr.bf16.mxu0 0
    %107 = vmatpush1.bf16.msra.mxu0 0
    %108 = vmatprep.subr.bf16.mxu0 0
    %109 = vmatpush1.bf16.msra.mxu0 0
    %110 = vmatprep.subr.bf16.mxu0 0
    %111 = vmatpush1.bf16.msra.mxu0 0
    %112 = vmatprep.subr.bf16.mxu0 0
    %113 = vmatpush1.bf16.msra.mxu0 0
    %114 = vmatprep.subr.bf16.mxu0 0
    %115 = vmatpush1.bf16.msra.mxu0 0
    %116 = vmatprep.subr.bf16.mxu0 0
    %117 = vmatpush1.bf16.msra.mxu0 0
    %118 = vmatprep.subr.bf16.mxu0 0
    %119 = vmatpush1.bf16.msra.mxu0 0
    %120 = vmatprep.subr.bf16.mxu0 0
    %121 = vmatpush1.bf16.msra.mxu0 0
    %122 = vmatprep.subr.bf16.mxu0 0
    %123 = vmatpush1.bf16.msra.mxu0 0
    %124 = vmatprep.subr.bf16.mxu0 0
    %125 = vmatpush1.bf16.msra.mxu0 0
    %126 = vmatprep.subr.bf16.mxu0 0
    %127 = vmatpush1.bf16.msra.mxu0 0
    %128 = vmatprep.mubr.bf16.mxu0 0
    %129 = vmatmul.mubr.bf16.gmra.mrb[0].mxu0 %v94
    %v130 = vpop.f32.mrb[0].mxu0
    %v131 = vadd.f32 0.0, %v130
    %v132 = vpop.f32.mrb[0].mxu0
    %v133 = vadd.f32 0.0, %v132
    %v134 = vpop.f32.mrb[0].mxu0
    %v135 = vadd.f32 0.0, %v134
    %v136 = vpop.f32.mrb[0].mxu0
    %v137 = vadd.f32 0.0, %v136
    %138 = vdwg.mxu0
    %v147 = vcombine.low %v68, %v69
    %v148 = vcombine.low %v70, %v71
    %v149 = vcombine.low %v72, %v73
    %v150 = vcombine.low %v74, %v75
    %v152 = vunpack.c.l.s4 1966171168
    %v153 = vunpack.c.0.s8 %v152
    %v154 = vlaneseq
    %v155 = vshrl.u32 %v154, 7
    %v156 = vsub.s32 %v153, %v155
    %v157 = vrot.slane %v147, %v156
    %v159 = vunpack.c.l.s4 1966171168
    %v160 = vunpack.c.0.s8 %v159
    %v161 = vlaneseq
    %v162 = vshrl.u32 %v161, 7
    %v163 = vsub.s32 %v160, %v162
    %v164 = vrot.slane %v148, %v163
    %v166 = vunpack.c.l.s4 1966171168
    %v167 = vunpack.c.0.s8 %v166
    %v168 = vlaneseq
    %v169 = vshrl.u32 %v168, 7
    %v170 = vsub.s32 %v167, %v169
    %v171 = vrot.slane %v149, %v170
    %v173 = vunpack.c.l.s4 1966171168
    %v174 = vunpack.c.0.s8 %v173
    %v175 = vlaneseq
    %v176 = vshrl.u32 %v175, 7
    %v177 = vsub.s32 %v174, %v176
    %v178 = vrot.slane %v150, %v177
    %v179 = vcombine.low %v157, %v164
    %v180 = vcombine.low %v171, %v178
    %v182 = vunpack.c.l.s4 1966171168
    %v183 = vunpack.c.0.s8 %v182
    %v184 = vlaneseq
    %v185 = vshrl.u32 %v184, 7
    %v186 = vsub.s32 %v183, %v185
    %v187 = vrot.slane %v179, %v186
    %v189 = vunpack.c.l.s4 1966171168
    %v190 = vunpack.c.0.s8 %v189
    %v191 = vlaneseq
    %v192 = vshrl.u32 %v191, 7
    %v193 = vsub.s32 %v190, %v192
    %v194 = vrot.slane %v180, %v193
    %v195 = vcombine.low %v187, %v194
    %v200 = vunpack.c.l.b16 %v76
    %v201 = vunpack.c.h.b16 %v76
    %v202 = vunpack.c.l.b16 %v77
    %v203 = vunpack.c.h.b16 %v77
    %v204 = vunpack.c.l.b16 %v78
    %v205 = vunpack.c.h.b16 %v78
    %v206 = vunpack.c.l.b16 %v79
    %v207 = vunpack.c.h.b16 %v79
    %v208 = vpack.c.b16 %v202, %v200
    %v209 = vpack.c.b16 %v203, %v201
    %v210 = vpack.c.b16 %v206, %v204
    %v211 = vpack.c.b16 %v207, %v205
    %vm216 = vcmask 261120
    %v218 = vsel %vm216, %v195, 0
    %220 = vmatprep.subr.bf16.mxu0 %v209
    %221 = vmatpush1.bf16.msra.mxu0 %v208
    %222 = vmatprep.subr.bf16.mxu0 %v211
    %223 = vmatpush1.bf16.msra.mxu0 %v210
    %224 = vmatprep.subr.bf16.mxu0 0
    %225 = vmatpush1.bf16.msra.mxu0 0
    %226 = vmatprep.subr.bf16.mxu0 0
    %227 = vmatpush1.bf16.msra.mxu0 0
    %228 = vmatprep.subr.bf16.mxu0 0
    %229 = vmatpush1.bf16.msra.mxu0 0
    %230 = vmatprep.subr.bf16.mxu0 0
    %231 = vmatpush1.bf16.msra.mxu0 0
    %232 = vmatprep.subr.bf16.mxu0 0
    %233 = vmatpush1.bf16.msra.mxu0 0
    %234 = vmatprep.subr.bf16.mxu0 0
    %235 = vmatpush1.bf16.msra.mxu0 0
    %236 = vmatprep.subr.bf16.mxu0 0
    %237 = vmatpush1.bf16.msra.mxu0 0
    %238 = vmatprep.subr.bf16.mxu0 0
    %239 = vmatpush1.bf16.msra.mxu0 0
    %240 = vmatprep.subr.bf16.mxu0 0
    %241 = vmatpush1.bf16.msra.mxu0 0
    %242 = vmatprep.subr.bf16.mxu0 0
    %243 = vmatpush1.bf16.msra.mxu0 0
    %244 = vmatprep.subr.bf16.mxu0 0
    %245 = vmatpush1.bf16.msra.mxu0 0
    %246 = vmatprep.subr.bf16.mxu0 0
    %247 = vmatpush1.bf16.msra.mxu0 0
    %248 = vmatprep.subr.bf16.mxu0 0
    %249 = vmatpush1.bf16.msra.mxu0 0
    %250 = vmatprep.subr.bf16.mxu0 0
    %251 = vmatpush1.bf16.msra.mxu0 0
    %252 = vmatprep.mubr.bf16.mxu0 0
    %253 = vmatmul.mubr.bf16.gmra.mrb[0].mxu0 %v218
    %v254 = vpop.f32.mrb[0].mxu0
    %v255 = vadd.f32 %v131, %v254
    %v256 = vpop.f32.mrb[0].mxu0
    %v257 = vadd.f32 %v133, %v256
    %v258 = vpop.f32.mrb[0].mxu0
    %v259 = vadd.f32 %v135, %v258
    %v260 = vpop.f32.mrb[0].mxu0
    %v261 = vadd.f32 %v137, %v260
    %262 = vdwg.mxu0
    %vm263 = vcmp.gt.f32.partialorder %v255, 0.0
    %vm264 = vcmp.gt.f32.partialorder %v257, 0.0
    %vm265 = vcmp.gt.f32.partialorder %v259, 0.0
    %vm266 = vcmp.gt.f32.partialorder %v261, 0.0
    %v267 = vmul.f32 %v255, 0.01
    %v268 = vmul.f32 %v257, 0.01
    %v269 = vmul.f32 %v259, 0.01
    %v270 = vmul.f32 %v261, 0.01
    %v271 = vsel %vm263, %v255, %v267
    %v272 = vsel %vm264, %v257, %v268
    %v273 = vsel %vm265, %v259, %v269
    %v274 = vsel %vm266, %v261, %v270
    %v275 = vpack.c.bf16 %v273, %v271
    %v276 = vpack.c.bf16 %v274, %v272
    %v277 = vld [vmem:[%s4] sm:$0xff]
    %v278 = vld [vmem:[%s4 + $0x8] sm:$0xff]
    %v279 = vld [vmem:[%s4 + $0x10] sm:$0xff]
    %v280 = vld [vmem:[%s4 + $0x18] sm:$0xff]
    %v281 = vld [vmem:[%s4 + $0x20] sm:$0xff]
    %v282 = vld [vmem:[%s4 + $0x28] sm:$0xff]
    %v283 = vld [vmem:[%s4 + $0x30] sm:$0xff]
    %v284 = vld [vmem:[%s4 + $0x38] sm:$0xff]
    %v285 = vld [vmem:[%s4 + $0x40] sm:$0xff]
    %v286 = vld [vmem:[%s4 + $0x48] sm:$0xff]
    %v287 = vld [vmem:[%s4 + $0x50] sm:$0xff]
    %v288 = vld [vmem:[%s4 + $0x58] sm:$0xff]
    %v289 = vld [vmem:[%s4 + $0x60] sm:$0xff]
    %v290 = vld [vmem:[%s4 + $0x68] sm:$0xff]
    %v291 = vld [vmem:[%s4 + $0x70] sm:$0xff]
    %v292 = vld [vmem:[%s4 + $0x78] sm:$0xff]
    %v293 = vld [vmem:[%s4 + $0x80] sm:$0xff]
    %v294 = vld [vmem:[%s4 + $0x88] sm:$0xff]
    %v295 = vld [vmem:[%s4 + $0x90] sm:$0xff]
    %v296 = vld [vmem:[%s4 + $0x98] sm:$0xff]
    %v297 = vld [vmem:[%s4 + $0xa0] sm:$0xff]
    %v298 = vld [vmem:[%s4 + $0xa8] sm:$0xff]
    %v299 = vld [vmem:[%s4 + $0xb0] sm:$0xff]
    %v300 = vld [vmem:[%s4 + $0xb8] sm:$0xff]
    %v301 = vld [vmem:[%s4 + $0xc0] sm:$0xff]
    %v302 = vld [vmem:[%s4 + $0xc8] sm:$0xff]
    %v303 = vld [vmem:[%s4 + $0xd0] sm:$0xff]
    %v304 = vld [vmem:[%s4 + $0xd8] sm:$0xff]
    %v305 = vld [vmem:[%s4 + $0xe0] sm:$0xff]
    %v306 = vld [vmem:[%s4 + $0xe8] sm:$0xff]
    %v307 = vld [vmem:[%s4 + $0xf0] sm:$0xff]
    %v308 = vld [vmem:[%s4 + $0xf8] sm:$0xff]
    %v309 = vld [vmem:[%s4 + $0x100] sm:$0xff]
    %v310 = vld [vmem:[%s4 + $0x108] sm:$0xff]
    %v311 = vld [vmem:[%s4 + $0x110] sm:$0xff]
    %v312 = vld [vmem:[%s4 + $0x118] sm:$0xff]
    %v313 = vld [vmem:[%s4 + $0x120] sm:$0xff]
    %v314 = vld [vmem:[%s4 + $0x128] sm:$0xff]
    %v315 = vld [vmem:[%s4 + $0x130] sm:$0xff]
    %v316 = vld [vmem:[%s4 + $0x138] sm:$0xff]
    %v317 = vld [vmem:[%s4 + $0x140] sm:$0xff]
    %v318 = vld [vmem:[%s4 + $0x148] sm:$0xff]
    %v319 = vld [vmem:[%s4 + $0x150] sm:$0xff]
    %v320 = vld [vmem:[%s4 + $0x158] sm:$0xff]
    %v321 = vld [vmem:[%s4 + $0x160] sm:$0xff]
    %v322 = vld [vmem:[%s4 + $0x168] sm:$0xff]
    %v323 = vld [vmem:[%s4 + $0x170] sm:$0xff]
    %v324 = vld [vmem:[%s4 + $0x178] sm:$0xff]
    %v325 = vld [vmem:[%s4 + $0x180] sm:$0xff]
    %v326 = vld [vmem:[%s4 + $0x188] sm:$0xff]
    %v327 = vld [vmem:[%s4 + $0x190] sm:$0xff]
    %v328 = vld [vmem:[%s4 + $0x198] sm:$0xff]
    %v329 = vld [vmem:[%s4 + $0x1a0] sm:$0xff]
    %v330 = vld [vmem:[%s4 + $0x1a8] sm:$0xff]
    %v331 = vld [vmem:[%s4 + $0x1b0] sm:$0xff]
    %v332 = vld [vmem:[%s4 + $0x1b8] sm:$0xff]
    %v333 = vld [vmem:[%s4 + $0x1c0] sm:$0xff]
    %v334 = vld [vmem:[%s4 + $0x1c8] sm:$0xff]
    %v335 = vld [vmem:[%s4 + $0x1d0] sm:$0xff]
    %v336 = vld [vmem:[%s4 + $0x1d8] sm:$0xff]
    %v337 = vld [vmem:[%s4 + $0x1e0] sm:$0xff]
    %v338 = vld [vmem:[%s4 + $0x1e8] sm:$0xff]
    %v339 = vld [vmem:[%s4 + $0x1f0] sm:$0xff]
    %v340 = vld [vmem:[%s4 + $0x1f8] sm:$0xff]
    %v341 = vld [vmem:[%s5] sm:$0xf]
    %v343 = vlaneseq
    %v344 = vshrl.u32 %v343, 7
    %v345 = vsub.s32 0, %v344
    %v346 = vrot.slane %v341, %v345
    %v347 = vlaneseq
    %v348 = vshrl.u32 %v347, 7
    %v349 = vsub.s32 1, %v348
    %v350 = vrot.slane %v341, %v349
    %v351 = vlaneseq
    %v352 = vshrl.u32 %v351, 7
    %v353 = vsub.s32 2, %v352
    %v354 = vrot.slane %v341, %v353
    %v355 = vlaneseq
    %v356 = vshrl.u32 %v355, 7
    %v357 = vsub.s32 3, %v356
    %v358 = vrot.slane %v341, %v357
    %v427 = vunpack.c.l.b16 %v277
    %v428 = vunpack.c.h.b16 %v277
    %v429 = vunpack.c.l.b16 %v278
    %v430 = vunpack.c.h.b16 %v278
    %v431 = vunpack.c.l.b16 %v279
    %v432 = vunpack.c.h.b16 %v279
    %v433 = vunpack.c.l.b16 %v280
    %v434 = vunpack.c.h.b16 %v280
    %v435 = vunpack.c.l.b16 %v281
    %v436 = vunpack.c.h.b16 %v281
    %v437 = vunpack.c.l.b16 %v282
    %v438 = vunpack.c.h.b16 %v282
    %v439 = vunpack.c.l.b16 %v283
    %v440 = vunpack.c.h.b16 %v283
    %v441 = vunpack.c.l.b16 %v284
    %v442 = vunpack.c.h.b16 %v284
    %v443 = vunpack.c.l.b16 %v285
    %v444 = vunpack.c.h.b16 %v285
    %v445 = vunpack.c.l.b16 %v286
    %v446 = vunpack.c.h.b16 %v286
    %v447 = vunpack.c.l.b16 %v287
    %v448 = vunpack.c.h.b16 %v287
    %v449 = vunpack.c.l.b16 %v288
    %v450 = vunpack.c.h.b16 %v288
    %v451 = vunpack.c.l.b16 %v289
    %v452 = vunpack.c.h.b16 %v289
    %v453 = vunpack.c.l.b16 %v290
    %v454 = vunpack.c.h.b16 %v290
    %v455 = vunpack.c.l.b16 %v291
    %v456 = vunpack.c.h.b16 %v291
    %v457 = vunpack.c.l.b16 %v292
    %v458 = vunpack.c.h.b16 %v292
    %v459 = vunpack.c.l.b16 %v293
    %v460 = vunpack.c.h.b16 %v293
    %v461 = vunpack.c.l.b16 %v294
    %v462 = vunpack.c.h.b16 %v294
    %v463 = vunpack.c.l.b16 %v295
    %v464 = vunpack.c.h.b16 %v295
    %v465 = vunpack.c.l.b16 %v296
    %v466 = vunpack.c.h.b16 %v296
    %v467 = vunpack.c.l.b16 %v297
    %v468 = vunpack.c.h.b16 %v297
    %v469 = vunpack.c.l.b16 %v298
    %v470 = vunpack.c.h.b16 %v298
    %v471 = vunpack.c.l.b16 %v299
    %v472 = vunpack.c.h.b16 %v299
    %v473 = vunpack.c.l.b16 %v300
    %v474 = vunpack.c.h.b16 %v300
    %v475 = vunpack.c.l.b16 %v301
    %v476 = vunpack.c.h.b16 %v301
    %v477 = vunpack.c.l.b16 %v302
    %v478 = vunpack.c.h.b16 %v302
    %v479 = vunpack.c.l.b16 %v303
    %v480 = vunpack.c.h.b16 %v303
    %v481 = vunpack.c.l.b16 %v304
    %v482 = vunpack.c.h.b16 %v304
    %v483 = vunpack.c.l.b16 %v305
    %v484 = vunpack.c.h.b16 %v305
    %v485 = vunpack.c.l.b16 %v306
    %v486 = vunpack.c.h.b16 %v306
    %v487 = vunpack.c.l.b16 %v307
    %v488 = vunpack.c.h.b16 %v307
    %v489 = vunpack.c.l.b16 %v308
    %v490 = vunpack.c.h.b16 %v308
    %v491 = vunpack.c.l.b16 %v309
    %v492 = vunpack.c.h.b16 %v309
    %v493 = vunpack.c.l.b16 %v310
    %v494 = vunpack.c.h.b16 %v310
    %v495 = vunpack.c.l.b16 %v311
    %v496 = vunpack.c.h.b16 %v311
    %v497 = vunpack.c.l.b16 %v312
    %v498 = vunpack.c.h.b16 %v312
    %v499 = vunpack.c.l.b16 %v313
    %v500 = vunpack.c.h.b16 %v313
    %v501 = vunpack.c.l.b16 %v314
    %v502 = vunpack.c.h.b16 %v314
    %v503 = vunpack.c.l.b16 %v315
    %v504 = vunpack.c.h.b16 %v315
    %v505 = vunpack.c.l.b16 %v316
    %v506 = vunpack.c.h.b16 %v316
    %v507 = vunpack.c.l.b16 %v317
    %v508 = vunpack.c.h.b16 %v317
    %v509 = vunpack.c.l.b16 %v318
    %v510 = vunpack.c.h.b16 %v318
    %v511 = vunpack.c.l.b16 %v319
    %v512 = vunpack.c.h.b16 %v319
    %v513 = vunpack.c.l.b16 %v320
    %v514 = vunpack.c.h.b16 %v320
    %v515 = vunpack.c.l.b16 %v321
    %v516 = vunpack.c.h.b16 %v321
    %v517 = vunpack.c.l.b16 %v322
    %v518 = vunpack.c.h.b16 %v322
    %v519 = vunpack.c.l.b16 %v323
    %v520 = vunpack.c.h.b16 %v323
    %v521 = vunpack.c.l.b16 %v324
    %v522 = vunpack.c.h.b16 %v324
    %v523 = vunpack.c.l.b16 %v325
    %v524 = vunpack.c.h.b16 %v325
    %v525 = vunpack.c.l.b16 %v326
    %v526 = vunpack.c.h.b16 %v326
    %v527 = vunpack.c.l.b16 %v327
    %v528 = vunpack.c.h.b16 %v327
    %v529 = vunpack.c.l.b16 %v328
    %v530 = vunpack.c.h.b16 %v328
    %v531 = vunpack.c.l.b16 %v329
    %v532 = vunpack.c.h.b16 %v329
    %v533 = vunpack.c.l.b16 %v330
    %v534 = vunpack.c.h.b16 %v330
    %v535 = vunpack.c.l.b16 %v331
    %v536 = vunpack.c.h.b16 %v331
    %v537 = vunpack.c.l.b16 %v332
    %v538 = vunpack.c.h.b16 %v332
    %v539 = vunpack.c.l.b16 %v333
    %v540 = vunpack.c.h.b16 %v333
    %v541 = vunpack.c.l.b16 %v334
    %v542 = vunpack.c.h.b16 %v334
    %v543 = vunpack.c.l.b16 %v335
    %v544 = vunpack.c.h.b16 %v335
    %v545 = vunpack.c.l.b16 %v336
    %v546 = vunpack.c.h.b16 %v336
    %v547 = vunpack.c.l.b16 %v337
    %v548 = vunpack.c.h.b16 %v337
    %v549 = vunpack.c.l.b16 %v338
    %v550 = vunpack.c.h.b16 %v338
    %v551 = vunpack.c.l.b16 %v339
    %v552 = vunpack.c.h.b16 %v339
    %v553 = vunpack.c.l.b16 %v340
    %v554 = vunpack.c.h.b16 %v340
    %v555 = vpack.c.b16 %v431, %v427
    %v556 = vpack.c.b16 %v432, %v428
    %v557 = vpack.c.b16 %v433, %v429
    %v558 = vpack.c.b16 %v434, %v430
    %v559 = vpack.c.b16 %v439, %v435
    %v560 = vpack.c.b16 %v440, %v436
    %v561 = vpack.c.b16 %v441, %v437
    %v562 = vpack.c.b16 %v442, %v438
    %v563 = vpack.c.b16 %v447, %v443
    %v564 = vpack.c.b16 %v448, %v444
    %v565 = vpack.c.b16 %v449, %v445
    %v566 = vpack.c.b16 %v450, %v446
    %v567 = vpack.c.b16 %v455, %v451
    %v568 = vpack.c.b16 %v456, %v452
    %v569 = vpack.c.b16 %v457, %v453
    %v570 = vpack.c.b16 %v458, %v454
    %v571 = vpack.c.b16 %v463, %v459
    %v572 = vpack.c.b16 %v464, %v460
    %v573 = vpack.c.b16 %v465, %v461
    %v574 = vpack.c.b16 %v466, %v462
    %v575 = vpack.c.b16 %v471, %v467
    %v576 = vpack.c.b16 %v472, %v468
    %v577 = vpack.c.b16 %v473, %v469
    %v578 = vpack.c.b16 %v474, %v470
    %v579 = vpack.c.b16 %v479, %v475
    %v580 = vpack.c.b16 %v480, %v476
    %v581 = vpack.c.b16 %v481, %v477
    %v582 = vpack.c.b16 %v482, %v478
    %v583 = vpack.c.b16 %v487, %v483
    %v584 = vpack.c.b16 %v488, %v484
    %v585 = vpack.c.b16 %v489, %v485
    %v586 = vpack.c.b16 %v490, %v486
    %v587 = vpack.c.b16 %v495, %v491
    %v588 = vpack.c.b16 %v496, %v492
    %v589 = vpack.c.b16 %v497, %v493
    %v590 = vpack.c.b16 %v498, %v494
    %v591 = vpack.c.b16 %v503, %v499
    %v592 = vpack.c.b16 %v504, %v500
    %v593 = vpack.c.b16 %v505, %v501
    %v594 = vpack.c.b16 %v506, %v502
    %v595 = vpack.c.b16 %v511, %v507
    %v596 = vpack.c.b16 %v512, %v508
    %v597 = vpack.c.b16 %v513, %v509
    %v598 = vpack.c.b16 %v514, %v510
    %v599 = vpack.c.b16 %v519, %v515
    %v600 = vpack.c.b16 %v520, %v516
    %v601 = vpack.c.b16 %v521, %v517
    %v602 = vpack.c.b16 %v522, %v518
    %v603 = vpack.c.b16 %v527, %v523
    %v604 = vpack.c.b16 %v528, %v524
    %v605 = vpack.c.b16 %v529, %v525
    %v606 = vpack.c.b16 %v530, %v526
    %v607 = vpack.c.b16 %v535, %v531
    %v608 = vpack.c.b16 %v536, %v532
    %v609 = vpack.c.b16 %v537, %v533
    %v610 = vpack.c.b16 %v538, %v534
    %v611 = vpack.c.b16 %v543, %v539
    %v612 = vpack.c.b16 %v544, %v540
    %v613 = vpack.c.b16 %v545, %v541
    %v614 = vpack.c.b16 %v546, %v542
    %v615 = vpack.c.b16 %v551, %v547
    %v616 = vpack.c.b16 %v552, %v548
    %v617 = vpack.c.b16 %v553, %v549
    %v618 = vpack.c.b16 %v554, %v550
    %683 = vmatprep.subr.bf16.mxu0 %v556
    %684 = vmatpush1.bf16.msra.mxu0 %v555
    %685 = vmatprep.subr.bf16.mxu0 %v560
    %686 = vmatpush1.bf16.msra.mxu0 %v559
    %687 = vmatprep.subr.bf16.mxu0 %v564
    %688 = vmatpush1.bf16.msra.mxu0 %v563
    %689 = vmatprep.subr.bf16.mxu0 %v568
    %690 = vmatpush1.bf16.msra.mxu0 %v567
    %691 = vmatprep.subr.bf16.mxu0 %v572
    %692 = vmatpush1.bf16.msra.mxu0 %v571
    %693 = vmatprep.subr.bf16.mxu0 %v576
    %694 = vmatpush1.bf16.msra.mxu0 %v575
    %695 = vmatprep.subr.bf16.mxu0 %v580
    %696 = vmatpush1.bf16.msra.mxu0 %v579
    %697 = vmatprep.subr.bf16.mxu0 %v584
    %698 = vmatpush1.bf16.msra.mxu0 %v583
    %699 = vmatprep.subr.bf16.mxu0 %v588
    %700 = vmatpush1.bf16.msra.mxu0 %v587
    %701 = vmatprep.subr.bf16.mxu0 %v592
    %702 = vmatpush1.bf16.msra.mxu0 %v591
    %703 = vmatprep.subr.bf16.mxu0 %v596
    %704 = vmatpush1.bf16.msra.mxu0 %v595
    %705 = vmatprep.subr.bf16.mxu0 %v600
    %706 = vmatpush1.bf16.msra.mxu0 %v599
    %707 = vmatprep.subr.bf16.mxu0 %v604
    %708 = vmatpush1.bf16.msra.mxu0 %v603
    %709 = vmatprep.subr.bf16.mxu0 %v608
    %710 = vmatpush1.bf16.msra.mxu0 %v607
    %711 = vmatprep.subr.bf16.mxu0 %v612
    %712 = vmatpush1.bf16.msra.mxu0 %v611
    %713 = vmatprep.subr.bf16.mxu0 %v616
    %714 = vmatpush1.bf16.msra.mxu0 %v615
    %715 = vmatprep.mubr.bf16.mxu0 %v276
    %716 = vmatmul.mubr.bf16.gmra.mrb[0].mxu0 %v275
    %v717 = vpop.f32.mrb[0].mxu0
    %v718 = vadd.f32 %v346, %v717
    %v719 = vpop.f32.mrb[0].mxu0
    %v720 = vadd.f32 %v350, %v719
    %v721 = vpop.f32.mrb[0].mxu0
    %v722 = vadd.f32 %v346, %v721
    %v723 = vpop.f32.mrb[0].mxu0
    %v724 = vadd.f32 %v350, %v723
    %725 = vdwg.mxu0
    %726 = vmatprep.subr.bf16.mxu0 %v558
    %727 = vmatpush1.bf16.msra.mxu0 %v557
    %728 = vmatprep.subr.bf16.mxu0 %v562
    %729 = vmatpush1.bf16.msra.mxu0 %v561
    %730 = vmatprep.subr.bf16.mxu0 %v566
    %731 = vmatpush1.bf16.msra.mxu0 %v565
    %732 = vmatprep.subr.bf16.mxu0 %v570
    %733 = vmatpush1.bf16.msra.mxu0 %v569
    %734 = vmatprep.subr.bf16.mxu0 %v574
    %735 = vmatpush1.bf16.msra.mxu0 %v573
    %736 = vmatprep.subr.bf16.mxu0 %v578
    %737 = vmatpush1.bf16.msra.mxu0 %v577
    %738 = vmatprep.subr.bf16.mxu0 %v582
    %739 = vmatpush1.bf16.msra.mxu0 %v581
    %740 = vmatprep.subr.bf16.mxu0 %v586
    %741 = vmatpush1.bf16.msra.mxu0 %v585
    %742 = vmatprep.subr.bf16.mxu0 %v590
    %743 = vmatpush1.bf16.msra.mxu0 %v589
    %744 = vmatprep.subr.bf16.mxu0 %v594
    %745 = vmatpush1.bf16.msra.mxu0 %v593
    %746 = vmatprep.subr.bf16.mxu0 %v598
    %747 = vmatpush1.bf16.msra.mxu0 %v597
    %748 = vmatprep.subr.bf16.mxu0 %v602
    %749 = vmatpush1.bf16.msra.mxu0 %v601
    %750 = vmatprep.subr.bf16.mxu0 %v606
    %751 = vmatpush1.bf16.msra.mxu0 %v605
    %752 = vmatprep.subr.bf16.mxu0 %v610
    %753 = vmatpush1.bf16.msra.mxu0 %v609
    %754 = vmatprep.subr.bf16.mxu0 %v614
    %755 = vmatpush1.bf16.msra.mxu0 %v613
    %756 = vmatprep.subr.bf16.mxu0 %v618
    %757 = vmatpush1.bf16.msra.mxu0 %v617
    %758 = vmatprep.mubr.bf16.mxu0 %v276
    %759 = vmatmul.mubr.bf16.gmra.mrb[0].mxu0 %v275
    %v760 = vpop.f32.mrb[0].mxu0
    %v761 = vadd.f32 %v354, %v760
    %v762 = vpop.f32.mrb[0].mxu0
    %v763 = vadd.f32 %v358, %v762
    %v764 = vpop.f32.mrb[0].mxu0
    %v765 = vadd.f32 %v354, %v764
    %v766 = vpop.f32.mrb[0].mxu0
    %v767 = vadd.f32 %v358, %v766
    %768 = vdwg.mxu0
    %vm769 = vcmp.gt.f32.partialorder %v718, 0.0
    %vm770 = vcmp.gt.f32.partialorder %v720, 0.0
    %vm771 = vcmp.gt.f32.partialorder %v761, 0.0
    %vm772 = vcmp.gt.f32.partialorder %v763, 0.0
    %vm773 = vcmp.gt.f32.partialorder %v722, 0.0
    %vm774 = vcmp.gt.f32.partialorder %v724, 0.0
    %vm775 = vcmp.gt.f32.partialorder %v765, 0.0
    %vm776 = vcmp.gt.f32.partialorder %v767, 0.0
    %v777 = vmul.f32 %v718, 0.01
    %v778 = vmul.f32 %v720, 0.01
    %v779 = vmul.f32 %v761, 0.01
    %v780 = vmul.f32 %v763, 0.01
    %v781 = vmul.f32 %v722, 0.01
    %v782 = vmul.f32 %v724, 0.01
    %v783 = vmul.f32 %v765, 0.01
    %v784 = vmul.f32 %v767, 0.01
    %v785 = vsel %vm769, %v718, %v777
    %v786 = vsel %vm770, %v720, %v778
    %v787 = vsel %vm771, %v761, %v779
    %v788 = vsel %vm772, %v763, %v780
    %v789 = vsel %vm773, %v722, %v781
    %v790 = vsel %vm774, %v724, %v782
    %v791 = vsel %vm775, %v765, %v783
    %v792 = vsel %vm776, %v767, %v784
    %v793 = vpack.c.bf16 %v789, %v785
    %v794 = vpack.c.bf16 %v790, %v786
    %v795 = vpack.c.bf16 %v791, %v787
    %v796 = vpack.c.bf16 %v792, %v788
    %v797 = vld [vmem:[#allocation2] sm:$0xff]
    %v798 = vld [vmem:[#allocation2 + $0x8] sm:$0xff]
    %v799 = vld [vmem:[#allocation2 + $0x10] sm:$0xff]
    %v800 = vld [vmem:[#allocation2 + $0x18] sm:$0xff]
    %v801 = vld [vmem:[#allocation2 + $0x20] sm:$0xff]
    %v802 = vld [vmem:[#allocation2 + $0x28] sm:$0xff]
    %v803 = vld [vmem:[#allocation2 + $0x30] sm:$0xff]
    %v804 = vld [vmem:[#allocation2 + $0x38] sm:$0xff]
    %v805 = vld [vmem:[#allocation2 + $0x40] sm:$0xff]
    %v806 = vld [vmem:[#allocation2 + $0x48] sm:$0xff]
    %v807 = vld [vmem:[#allocation2 + $0x50] sm:$0xff]
    %v808 = vld [vmem:[#allocation2 + $0x58] sm:$0xff]
    %v809 = vld [vmem:[#allocation2 + $0x60] sm:$0xff]
    %v810 = vld [vmem:[#allocation2 + $0x68] sm:$0xff]
    %v811 = vld [vmem:[#allocation2 + $0x70] sm:$0xff]
    %v812 = vld [vmem:[#allocation2 + $0x78] sm:$0xff]
    %v813 = vld [vmem:[#allocation2 + $0x80] sm:$0xff]
    %v814 = vld [vmem:[#allocation2 + $0x88] sm:$0xff]
    %v815 = vld [vmem:[#allocation2 + $0x90] sm:$0xff]
    %v816 = vld [vmem:[#allocation2 + $0x98] sm:$0xff]
    %v817 = vld [vmem:[#allocation2 + $0xa0] sm:$0xff]
    %v818 = vld [vmem:[#allocation2 + $0xa8] sm:$0xff]
    %v819 = vld [vmem:[#allocation2 + $0xb0] sm:$0xff]
    %v820 = vld [vmem:[#allocation2 + $0xb8] sm:$0xff]
    %v821 = vld [vmem:[#allocation2 + $0xc0] sm:$0xff]
    %v822 = vld [vmem:[#allocation2 + $0xc8] sm:$0xff]
    %v823 = vld [vmem:[#allocation2 + $0xd0] sm:$0xff]
    %v824 = vld [vmem:[#allocation2 + $0xd8] sm:$0xff]
    %v825 = vld [vmem:[#allocation2 + $0xe0] sm:$0xff]
    %v826 = vld [vmem:[#allocation2 + $0xe8] sm:$0xff]
    %v827 = vld [vmem:[#allocation2 + $0xf0] sm:$0xff]
    %v828 = vld [vmem:[#allocation2 + $0xf8] sm:$0xff]
    %v829 = vld [vmem:[#allocation2 + $0x100] sm:$0xff]
    %v830 = vld [vmem:[#allocation2 + $0x108] sm:$0xff]
    %v831 = vld [vmem:[#allocation2 + $0x110] sm:$0xff]
    %v832 = vld [vmem:[#allocation2 + $0x118] sm:$0xff]
    %v833 = vld [vmem:[#allocation2 + $0x120] sm:$0xff]
    %v834 = vld [vmem:[#allocation2 + $0x128] sm:$0xff]
    %v835 = vld [vmem:[#allocation2 + $0x130] sm:$0xff]
    %v836 = vld [vmem:[#allocation2 + $0x138] sm:$0xff]
    %v837 = vld [vmem:[#allocation2 + $0x140] sm:$0xff]
    %v838 = vld [vmem:[#allocation2 + $0x148] sm:$0xff]
    %v839 = vld [vmem:[#allocation2 + $0x150] sm:$0xff]
    %v840 = vld [vmem:[#allocation2 + $0x158] sm:$0xff]
    %v841 = vld [vmem:[#allocation2 + $0x160] sm:$0xff]
    %v842 = vld [vmem:[#allocation2 + $0x168] sm:$0xff]
    %v843 = vld [vmem:[#allocation2 + $0x170] sm:$0xff]
    %v844 = vld [vmem:[#allocation2 + $0x178] sm:$0xff]
    %v845 = vld [vmem:[#allocation2 + $0x180] sm:$0xff]
    %v846 = vld [vmem:[#allocation2 + $0x188] sm:$0xff]
    %v847 = vld [vmem:[#allocation2 + $0x190] sm:$0xff]
    %v848 = vld [vmem:[#allocation2 + $0x198] sm:$0xff]
    %v849 = vld [vmem:[#allocation2 + $0x1a0] sm:$0xff]
    %v850 = vld [vmem:[#allocation2 + $0x1a8] sm:$0xff]
    %v851 = vld [vmem:[#allocation2 + $0x1b0] sm:$0xff]
    %v852 = vld [vmem:[#allocation2 + $0x1b8] sm:$0xff]
    %v853 = vld [vmem:[#allocation2 + $0x1c0] sm:$0xff]
    %v854 = vld [vmem:[#allocation2 + $0x1c8] sm:$0xff]
    %v855 = vld [vmem:[#allocation2 + $0x1d0] sm:$0xff]
    %v856 = vld [vmem:[#allocation2 + $0x1d8] sm:$0xff]
    %v857 = vld [vmem:[#allocation2 + $0x1e0] sm:$0xff]
    %v858 = vld [vmem:[#allocation2 + $0x1e8] sm:$0xff]
    %v859 = vld [vmem:[#allocation2 + $0x1f0] sm:$0xff]
    %v860 = vld [vmem:[#allocation2 + $0x1f8] sm:$0xff]
    %v861 = vld [vmem:[#allocation2 + $0x200] sm:$0xff]
    %v862 = vld [vmem:[#allocation2 + $0x208] sm:$0xff]
    %v863 = vld [vmem:[#allocation2 + $0x210] sm:$0xff]
    %v864 = vld [vmem:[#allocation2 + $0x218] sm:$0xff]
    %v865 = vld [vmem:[#allocation2 + $0x220] sm:$0xff]
    %v866 = vld [vmem:[#allocation2 + $0x228] sm:$0xff]
    %v867 = vld [vmem:[#allocation2 + $0x230] sm:$0xff]
    %v868 = vld [vmem:[#allocation2 + $0x238] sm:$0xff]
    %v869 = vld [vmem:[#allocation2 + $0x240] sm:$0xff]
    %v870 = vld [vmem:[#allocation2 + $0x248] sm:$0xff]
    %v871 = vld [vmem:[#allocation2 + $0x250] sm:$0xff]
    %v872 = vld [vmem:[#allocation2 + $0x258] sm:$0xff]
    %v873 = vld [vmem:[#allocation2 + $0x260] sm:$0xff]
    %v874 = vld [vmem:[#allocation2 + $0x268] sm:$0xff]
    %v875 = vld [vmem:[#allocation2 + $0x270] sm:$0xff]
    %v876 = vld [vmem:[#allocation2 + $0x278] sm:$0xff]
    %v877 = vld [vmem:[#allocation2 + $0x280] sm:$0xff]
    %v878 = vld [vmem:[#allocation2 + $0x288] sm:$0xff]
    %v879 = vld [vmem:[#allocation2 + $0x290] sm:$0xff]
    %v880 = vld [vmem:[#allocation2 + $0x298] sm:$0xff]
    %v881 = vld [vmem:[#allocation2 + $0x2a0] sm:$0xff]
    %v882 = vld [vmem:[#allocation2 + $0x2a8] sm:$0xff]
    %v883 = vld [vmem:[#allocation2 + $0x2b0] sm:$0xff]
    %v884 = vld [vmem:[#allocation2 + $0x2b8] sm:$0xff]
    %v885 = vld [vmem:[#allocation2 + $0x2c0] sm:$0xff]
    %v886 = vld [vmem:[#allocation2 + $0x2c8] sm:$0xff]
    %v887 = vld [vmem:[#allocation2 + $0x2d0] sm:$0xff]
    %v888 = vld [vmem:[#allocation2 + $0x2d8] sm:$0xff]
    %v889 = vld [vmem:[#allocation2 + $0x2e0] sm:$0xff]
    %v890 = vld [vmem:[#allocation2 + $0x2e8] sm:$0xff]
    %v891 = vld [vmem:[#allocation2 + $0x2f0] sm:$0xff]
    %v892 = vld [vmem:[#allocation2 + $0x2f8] sm:$0xff]
    %v893 = vld [vmem:[#allocation2 + $0x300] sm:$0xff]
    %v894 = vld [vmem:[#allocation2 + $0x308] sm:$0xff]
    %v895 = vld [vmem:[#allocation2 + $0x310] sm:$0xff]
    %v896 = vld [vmem:[#allocation2 + $0x318] sm:$0xff]
    %v897 = vld [vmem:[#allocation2 + $0x320] sm:$0xff]
    %v898 = vld [vmem:[#allocation2 + $0x328] sm:$0xff]
    %v899 = vld [vmem:[#allocation2 + $0x330] sm:$0xff]
    %v900 = vld [vmem:[#allocation2 + $0x338] sm:$0xff]
    %v901 = vld [vmem:[#allocation2 + $0x340] sm:$0xff]
    %v902 = vld [vmem:[#allocation2 + $0x348] sm:$0xff]
    %v903 = vld [vmem:[#allocation2 + $0x350] sm:$0xff]
    %v904 = vld [vmem:[#allocation2 + $0x358] sm:$0xff]
    %v905 = vld [vmem:[#allocation2 + $0x360] sm:$0xff]
    %v906 = vld [vmem:[#allocation2 + $0x368] sm:$0xff]
    %v907 = vld [vmem:[#allocation2 + $0x370] sm:$0xff]
    %v908 = vld [vmem:[#allocation2 + $0x378] sm:$0xff]
    %v909 = vld [vmem:[#allocation2 + $0x380] sm:$0xff]
    %v910 = vld [vmem:[#allocation2 + $0x388] sm:$0xff]
    %v911 = vld [vmem:[#allocation2 + $0x390] sm:$0xff]
    %v912 = vld [vmem:[#allocation2 + $0x398] sm:$0xff]
    %v913 = vld [vmem:[#allocation2 + $0x3a0] sm:$0xff]
    %v914 = vld [vmem:[#allocation2 + $0x3a8] sm:$0xff]
    %v915 = vld [vmem:[#allocation2 + $0x3b0] sm:$0xff]
    %v916 = vld [vmem:[#allocation2 + $0x3b8] sm:$0xff]
    %v917 = vld [vmem:[#allocation2 + $0x3c0] sm:$0xff]
    %v918 = vld [vmem:[#allocation2 + $0x3c8] sm:$0xff]
    %v919 = vld [vmem:[#allocation2 + $0x3d0] sm:$0xff]
    %v920 = vld [vmem:[#allocation2 + $0x3d8] sm:$0xff]
    %v921 = vld [vmem:[#allocation2 + $0x3e0] sm:$0xff]
    %v922 = vld [vmem:[#allocation2 + $0x3e8] sm:$0xff]
    %v923 = vld [vmem:[#allocation2 + $0x3f0] sm:$0xff]
    %v924 = vld [vmem:[#allocation2 + $0x3f8] sm:$0xff]
    %v925 = vld [vmem:[#allocation2 + $0x400] sm:$0xff]
    %v926 = vld [vmem:[#allocation2 + $0x408] sm:$0xff]
    %v927 = vld [vmem:[#allocation2 + $0x410] sm:$0xff]
    %v928 = vld [vmem:[#allocation2 + $0x418] sm:$0xff]
    %v929 = vld [vmem:[#allocation2 + $0x420] sm:$0xff]
    %v930 = vld [vmem:[#allocation2 + $0x428] sm:$0xff]
    %v931 = vld [vmem:[#allocation2 + $0x430] sm:$0xff]
    %v932 = vld [vmem:[#allocation2 + $0x438] sm:$0xff]
    %v933 = vld [vmem:[#allocation2 + $0x440] sm:$0xff]
    %v934 = vld [vmem:[#allocation2 + $0x448] sm:$0xff]
    %v935 = vld [vmem:[#allocation2 + $0x450] sm:$0xff]
    %v936 = vld [vmem:[#allocation2 + $0x458] sm:$0xff]
    %v937 = vld [vmem:[#allocation2 + $0x460] sm:$0xff]
    %v938 = vld [vmem:[#allocation2 + $0x468] sm:$0xff]
    %v939 = vld [vmem:[#allocation2 + $0x470] sm:$0xff]
    %v940 = vld [vmem:[#allocation2 + $0x478] sm:$0xff]
    %v941 = vld [vmem:[#allocation2 + $0x480] sm:$0xff]
    %v942 = vld [vmem:[#allocation2 + $0x488] sm:$0xff]
    %v943 = vld [vmem:[#allocation2 + $0x490] sm:$0xff]
    %v944 = vld [vmem:[#allocation2 + $0x498] sm:$0xff]
    %v945 = vld [vmem:[#allocation2 + $0x4a0] sm:$0xff]
    %v946 = vld [vmem:[#allocation2 + $0x4a8] sm:$0xff]
    %v947 = vld [vmem:[#allocation2 + $0x4b0] sm:$0xff]
    %v948 = vld [vmem:[#allocation2 + $0x4b8] sm:$0xff]
    %v949 = vld [vmem:[#allocation2 + $0x4c0] sm:$0xff]
    %v950 = vld [vmem:[#allocation2 + $0x4c8] sm:$0xff]
    %v951 = vld [vmem:[#allocation2 + $0x4d0] sm:$0xff]
    %v952 = vld [vmem:[#allocation2 + $0x4d8] sm:$0xff]
    %v953 = vld [vmem:[#allocation2 + $0x4e0] sm:$0xff]
    %v954 = vld [vmem:[#allocation2 + $0x4e8] sm:$0xff]
    %v955 = vld [vmem:[#allocation2 + $0x4f0] sm:$0xff]
    %v956 = vld [vmem:[#allocation2 + $0x4f8] sm:$0xff]
    %v957 = vld [vmem:[#allocation2 + $0x500] sm:$0xff]
    %v958 = vld [vmem:[#allocation2 + $0x508] sm:$0xff]
    %v959 = vld [vmem:[#allocation2 + $0x510] sm:$0xff]
    %v960 = vld [vmem:[#allocation2 + $0x518] sm:$0xff]
    %v961 = vld [vmem:[#allocation2 + $0x520] sm:$0xff]
    %v962 = vld [vmem:[#allocation2 + $0x528] sm:$0xff]
    %v963 = vld [vmem:[#allocation2 + $0x530] sm:$0xff]
    %v964 = vld [vmem:[#allocation2 + $0x538] sm:$0xff]
    %v965 = vld [vmem:[#allocation2 + $0x540] sm:$0xff]
    %v966 = vld [vmem:[#allocation2 + $0x548] sm:$0xff]
    %v967 = vld [vmem:[#allocation2 + $0x550] sm:$0xff]
    %v968 = vld [vmem:[#allocation2 + $0x558] sm:$0xff]
    %v969 = vld [vmem:[#allocation2 + $0x560] sm:$0xff]
    %v970 = vld [vmem:[#allocation2 + $0x568] sm:$0xff]
    %v971 = vld [vmem:[#allocation2 + $0x570] sm:$0xff]
    %v972 = vld [vmem:[#allocation2 + $0x578] sm:$0xff]
    %v973 = vld [vmem:[#allocation2 + $0x580] sm:$0xff]
    %v974 = vld [vmem:[#allocation2 + $0x588] sm:$0xff]
    %v975 = vld [vmem:[#allocation2 + $0x590] sm:$0xff]
    %v976 = vld [vmem:[#allocation2 + $0x598] sm:$0xff]
    %v977 = vld [vmem:[#allocation2 + $0x5a0] sm:$0xff]
    %v978 = vld [vmem:[#allocation2 + $0x5a8] sm:$0xff]
    %v979 = vld [vmem:[#allocation2 + $0x5b0] sm:$0xff]
    %v980 = vld [vmem:[#allocation2 + $0x5b8] sm:$0xff]
    %v981 = vld [vmem:[#allocation2 + $0x5c0] sm:$0xff]
    %v982 = vld [vmem:[#allocation2 + $0x5c8] sm:$0xff]
    %v983 = vld [vmem:[#allocation2 + $0x5d0] sm:$0xff]
    %v984 = vld [vmem:[#allocation2 + $0x5d8] sm:$0xff]
    %v985 = vld [vmem:[#allocation2 + $0x5e0] sm:$0xff]
    %v986 = vld [vmem:[#allocation2 + $0x5e8] sm:$0xff]
    %v987 = vld [vmem:[#allocation2 + $0x5f0] sm:$0xff]
    %v988 = vld [vmem:[#allocation2 + $0x5f8] sm:$0xff]
    %v989 = vld [vmem:[#allocation2 + $0x600] sm:$0xff]
    %v990 = vld [vmem:[#allocation2 + $0x608] sm:$0xff]
    %v991 = vld [vmem:[#allocation2 + $0x610] sm:$0xff]
    %v992 = vld [vmem:[#allocation2 + $0x618] sm:$0xff]
    %v993 = vld [vmem:[#allocation2 + $0x620] sm:$0xff]
    %v994 = vld [vmem:[#allocation2 + $0x628] sm:$0xff]
    %v995 = vld [vmem:[#allocation2 + $0x630] sm:$0xff]
    %v996 = vld [vmem:[#allocation2 + $0x638] sm:$0xff]
    %v997 = vld [vmem:[#allocation2 + $0x640] sm:$0xff]
    %v998 = vld [vmem:[#allocation2 + $0x648] sm:$0xff]
    %v999 = vld [vmem:[#allocation2 + $0x650] sm:$0xff]
    %v1000 = vld [vmem:[#allocation2 + $0x658] sm:$0xff]
    %v1001 = vld [vmem:[#allocation2 + $0x660] sm:$0xff]
    %v1002 = vld [vmem:[#allocation2 + $0x668] sm:$0xff]
    %v1003 = vld [vmem:[#allocation2 + $0x670] sm:$0xff]
    %v1004 = vld [vmem:[#allocation2 + $0x678] sm:$0xff]
    %v1005 = vld [vmem:[#allocation2 + $0x680] sm:$0xff]
    %v1006 = vld [vmem:[#allocation2 + $0x688] sm:$0xff]
    %v1007 = vld [vmem:[#allocation2 + $0x690] sm:$0xff]
    %v1008 = vld [vmem:[#allocation2 + $0x698] sm:$0xff]
    %v1009 = vld [vmem:[#allocation2 + $0x6a0] sm:$0xff]
    %v1010 = vld [vmem:[#allocation2 + $0x6a8] sm:$0xff]
    %v1011 = vld [vmem:[#allocation2 + $0x6b0] sm:$0xff]
    %v1012 = vld [vmem:[#allocation2 + $0x6b8] sm:$0xff]
    %v1013 = vld [vmem:[#allocation2 + $0x6c0] sm:$0xff]
    %v1014 = vld [vmem:[#allocation2 + $0x6c8] sm:$0xff]
    %v1015 = vld [vmem:[#allocation2 + $0x6d0] sm:$0xff]
    %v1016 = vld [vmem:[#allocation2 + $0x6d8] sm:$0xff]
    %v1017 = vld [vmem:[#allocation2 + $0x6e0] sm:$0xff]
    %v1018 = vld [vmem:[#allocation2 + $0x6e8] sm:$0xff]
    %v1019 = vld [vmem:[#allocation2 + $0x6f0] sm:$0xff]
    %v1020 = vld [vmem:[#allocation2 + $0x6f8] sm:$0xff]
    %v1021 = vld [vmem:[#allocation2 + $0x700] sm:$0xff]
    %v1022 = vld [vmem:[#allocation2 + $0x708] sm:$0xff]
    %v1023 = vld [vmem:[#allocation2 + $0x710] sm:$0xff]
    %v1024 = vld [vmem:[#allocation2 + $0x718] sm:$0xff]
    %v1025 = vld [vmem:[#allocation2 + $0x720] sm:$0xff]
    %v1026 = vld [vmem:[#allocation2 + $0x728] sm:$0xff]
    %v1027 = vld [vmem:[#allocation2 + $0x730] sm:$0xff]
    %v1028 = vld [vmem:[#allocation2 + $0x738] sm:$0xff]
    %v1029 = vld [vmem:[#allocation2 + $0x740] sm:$0xff]
    %v1030 = vld [vmem:[#allocation2 + $0x748] sm:$0xff]
    %v1031 = vld [vmem:[#allocation2 + $0x750] sm:$0xff]
    %v1032 = vld [vmem:[#allocation2 + $0x758] sm:$0xff]
    %v1033 = vld [vmem:[#allocation2 + $0x760] sm:$0xff]
    %v1034 = vld [vmem:[#allocation2 + $0x768] sm:$0xff]
    %v1035 = vld [vmem:[#allocation2 + $0x770] sm:$0xff]
    %v1036 = vld [vmem:[#allocation2 + $0x778] sm:$0xff]
    %v1037 = vld [vmem:[#allocation2 + $0x780] sm:$0xff]
    %v1038 = vld [vmem:[#allocation2 + $0x788] sm:$0xff]
    %v1039 = vld [vmem:[#allocation2 + $0x790] sm:$0xff]
    %v1040 = vld [vmem:[#allocation2 + $0x798] sm:$0xff]
    %v1041 = vld [vmem:[#allocation2 + $0x7a0] sm:$0xff]
    %v1042 = vld [vmem:[#allocation2 + $0x7a8] sm:$0xff]
    %v1043 = vld [vmem:[#allocation2 + $0x7b0] sm:$0xff]
    %v1044 = vld [vmem:[#allocation2 + $0x7b8] sm:$0xff]
    %v1045 = vld [vmem:[#allocation2 + $0x7c0] sm:$0xff]
    %v1046 = vld [vmem:[#allocation2 + $0x7c8] sm:$0xff]
    %v1047 = vld [vmem:[#allocation2 + $0x7d0] sm:$0xff]
    %v1048 = vld [vmem:[#allocation2 + $0x7d8] sm:$0xff]
    %v1049 = vld [vmem:[#allocation2 + $0x7e0] sm:$0xff]
    %v1050 = vld [vmem:[#allocation2 + $0x7e8] sm:$0xff]
    %v1051 = vld [vmem:[#allocation2 + $0x7f0] sm:$0xff]
    %v1052 = vld [vmem:[#allocation2 + $0x7f8] sm:$0xff]
    %v1053 = vld [vmem:[%s7] sm:$0xff]
    %v1055 = vlaneseq
    %v1056 = vshrl.u32 %v1055, 7
    %v1057 = vsub.s32 0, %v1056
    %v1058 = vrot.slane %v1053, %v1057
    %v1059 = vlaneseq
    %v1060 = vshrl.u32 %v1059, 7
    %v1061 = vsub.s32 1, %v1060
    %v1062 = vrot.slane %v1053, %v1061
    %v1063 = vlaneseq
    %v1064 = vshrl.u32 %v1063, 7
    %v1065 = vsub.s32 2, %v1064
    %v1066 = vrot.slane %v1053, %v1065
    %v1067 = vlaneseq
    %v1068 = vshrl.u32 %v1067, 7
    %v1069 = vsub.s32 3, %v1068
    %v1070 = vrot.slane %v1053, %v1069
    %v1071 = vlaneseq
    %v1072 = vshrl.u32 %v1071, 7
    %v1073 = vsub.s32 4, %v1072
    %v1074 = vrot.slane %v1053, %v1073
    %v1075 = vlaneseq
    %v1076 = vshrl.u32 %v1075, 7
    %v1077 = vsub.s32 5, %v1076
    %v1078 = vrot.slane %v1053, %v1077
    %v1079 = vlaneseq
    %v1080 = vshrl.u32 %v1079, 7
    %v1081 = vsub.s32 6, %v1080
    %v1082 = vrot.slane %v1053, %v1081
    %v1083 = vlaneseq
    %v1084 = vshrl.u32 %v1083, 7
    %v1085 = vsub.s32 7, %v1084
    %v1086 = vrot.slane %v1053, %v1085
    %v1351 = vunpack.c.l.b16 %v797
    %v1352 = vunpack.c.h.b16 %v797
    %v1353 = vunpack.c.l.b16 %v798
    %v1354 = vunpack.c.h.b16 %v798
    %v1355 = vunpack.c.l.b16 %v799
    %v1356 = vunpack.c.h.b16 %v799
    %v1357 = vunpack.c.l.b16 %v800
    %v1358 = vunpack.c.h.b16 %v800
    %v1359 = vunpack.c.l.b16 %v801
    %v1360 = vunpack.c.h.b16 %v801
    %v1361 = vunpack.c.l.b16 %v802
    %v1362 = vunpack.c.h.b16 %v802
    %v1363 = vunpack.c.l.b16 %v803
    %v1364 = vunpack.c.h.b16 %v803
    %v1365 = vunpack.c.l.b16 %v804
    %v1366 = vunpack.c.h.b16 %v804
    %v1367 = vunpack.c.l.b16 %v805
    %v1368 = vunpack.c.h.b16 %v805
    %v1369 = vunpack.c.l.b16 %v806
    %v1370 = vunpack.c.h.b16 %v806
    %v1371 = vunpack.c.l.b16 %v807
    %v1372 = vunpack.c.h.b16 %v807
    %v1373 = vunpack.c.l.b16 %v808
    %v1374 = vunpack.c.h.b16 %v808
    %v1375 = vunpack.c.l.b16 %v809
    %v1376 = vunpack.c.h.b16 %v809
    %v1377 = vunpack.c.l.b16 %v810
    %v1378 = vunpack.c.h.b16 %v810
    %v1379 = vunpack.c.l.b16 %v811
    %v1380 = vunpack.c.h.b16 %v811
    %v1381 = vunpack.c.l.b16 %v812
    %v1382 = vunpack.c.h.b16 %v812
    %v1383 = vunpack.c.l.b16 %v813
    %v1384 = vunpack.c.h.b16 %v813
    %v1385 = vunpack.c.l.b16 %v814
    %v1386 = vunpack.c.h.b16 %v814
    %v1387 = vunpack.c.l.b16 %v815
    %v1388 = vunpack.c.h.b16 %v815
    %v1389 = vunpack.c.l.b16 %v816
    %v1390 = vunpack.c.h.b16 %v816
    %v1391 = vunpack.c.l.b16 %v817
    %v1392 = vunpack.c.h.b16 %v817
    %v1393 = vunpack.c.l.b16 %v818
    %v1394 = vunpack.c.h.b16 %v818
    %v1395 = vunpack.c.l.b16 %v819
    %v1396 = vunpack.c.h.b16 %v819
    %v1397 = vunpack.c.l.b16 %v820
    %v1398 = vunpack.c.h.b16 %v820
    %v1399 = vunpack.c.l.b16 %v821
    %v1400 = vunpack.c.h.b16 %v821
    %v1401 = vunpack.c.l.b16 %v822
    %v1402 = vunpack.c.h.b16 %v822
    %v1403 = vunpack.c.l.b16 %v823
    %v1404 = vunpack.c.h.b16 %v823
    %v1405 = vunpack.c.l.b16 %v824
    %v1406 = vunpack.c.h.b16 %v824
    %v1407 = vunpack.c.l.b16 %v825
    %v1408 = vunpack.c.h.b16 %v825
    %v1409 = vunpack.c.l.b16 %v826
    %v1410 = vunpack.c.h.b16 %v826
    %v1411 = vunpack.c.l.b16 %v827
    %v1412 = vunpack.c.h.b16 %v827
    %v1413 = vunpack.c.l.b16 %v828
    %v1414 = vunpack.c.h.b16 %v828
    %v1415 = vunpack.c.l.b16 %v829
    %v1416 = vunpack.c.h.b16 %v829
    %v1417 = vunpack.c.l.b16 %v830
    %v1418 = vunpack.c.h.b16 %v830
    %v1419 = vunpack.c.l.b16 %v831
    %v1420 = vunpack.c.h.b16 %v831
    %v1421 = vunpack.c.l.b16 %v832
    %v1422 = vunpack.c.h.b16 %v832
    %v1423 = vunpack.c.l.b16 %v833
    %v1424 = vunpack.c.h.b16 %v833
    %v1425 = vunpack.c.l.b16 %v834
    %v1426 = vunpack.c.h.b16 %v834
    %v1427 = vunpack.c.l.b16 %v835
    %v1428 = vunpack.c.h.b16 %v835
    %v1429 = vunpack.c.l.b16 %v836
    %v1430 = vunpack.c.h.b16 %v836
    %v1431 = vunpack.c.l.b16 %v837
    %v1432 = vunpack.c.h.b16 %v837
    %v1433 = vunpack.c.l.b16 %v838
    %v1434 = vunpack.c.h.b16 %v838
    %v1435 = vunpack.c.l.b16 %v839
    %v1436 = vunpack.c.h.b16 %v839
    %v1437 = vunpack.c.l.b16 %v840
    %v1438 = vunpack.c.h.b16 %v840
    %v1439 = vunpack.c.l.b16 %v841
    %v1440 = vunpack.c.h.b16 %v841
    %v1441 = vunpack.c.l.b16 %v842
    %v1442 = vunpack.c.h.b16 %v842
    %v1443 = vunpack.c.l.b16 %v843
    %v1444 = vunpack.c.h.b16 %v843
    %v1445 = vunpack.c.l.b16 %v844
    %v1446 = vunpack.c.h.b16 %v844
    %v1447 = vunpack.c.l.b16 %v845
    %v1448 = vunpack.c.h.b16 %v845
    %v1449 = vunpack.c.l.b16 %v846
    %v1450 = vunpack.c.h.b16 %v846
    %v1451 = vunpack.c.l.b16 %v847
    %v1452 = vunpack.c.h.b16 %v847
    %v1453 = vunpack.c.l.b16 %v848
    %v1454 = vunpack.c.h.b16 %v848
    %v1455 = vunpack.c.l.b16 %v849
    %v1456 = vunpack.c.h.b16 %v849
    %v1457 = vunpack.c.l.b16 %v850
    %v1458 = vunpack.c.h.b16 %v850
    %v1459 = vunpack.c.l.b16 %v851
    %v1460 = vunpack.c.h.b16 %v851
    %v1461 = vunpack.c.l.b16 %v852
    %v1462 = vunpack.c.h.b16 %v852
    %v1463 = vunpack.c.l.b16 %v853
    %v1464 = vunpack.c.h.b16 %v853
    %v1465 = vunpack.c.l.b16 %v854
    %v1466 = vunpack.c.h.b16 %v854
    %v1467 = vunpack.c.l.b16 %v855
    %v1468 = vunpack.c.h.b16 %v855
    %v1469 = vunpack.c.l.b16 %v856
    %v1470 = vunpack.c.h.b16 %v856
    %v1471 = vunpack.c.l.b16 %v857
    %v1472 = vunpack.c.h.b16 %v857
    %v1473 = vunpack.c.l.b16 %v858
    %v1474 = vunpack.c.h.b16 %v858
    %v1475 = vunpack.c.l.b16 %v859
    %v1476 = vunpack.c.h.b16 %v859
    %v1477 = vunpack.c.l.b16 %v860
    %v1478 = vunpack.c.h.b16 %v860
    %v1479 = vunpack.c.l.b16 %v861
    %v1480 = vunpack.c.h.b16 %v861
    %v1481 = vunpack.c.l.b16 %v862
    %v1482 = vunpack.c.h.b16 %v862
    %v1483 = vunpack.c.l.b16 %v863
    %v1484 = vunpack.c.h.b16 %v863
    %v1485 = vunpack.c.l.b16 %v864
    %v1486 = vunpack.c.h.b16 %v864
    %v1487 = vunpack.c.l.b16 %v865
    %v1488 = vunpack.c.h.b16 %v865
    %v1489 = vunpack.c.l.b16 %v866
    %v1490 = vunpack.c.h.b16 %v866
    %v1491 = vunpack.c.l.b16 %v867
    %v1492 = vunpack.c.h.b16 %v867
    %v1493 = vunpack.c.l.b16 %v868
    %v1494 = vunpack.c.h.b16 %v868
    %v1495 = vunpack.c.l.b16 %v869
    %v1496 = vunpack.c.h.b16 %v869
    %v1497 = vunpack.c.l.b16 %v870
    %v1498 = vunpack.c.h.b16 %v870
    %v1499 = vunpack.c.l.b16 %v871
    %v1500 = vunpack.c.h.b16 %v871
    %v1501 = vunpack.c.l.b16 %v872
    %v1502 = vunpack.c.h.b16 %v872
    %v1503 = vunpack.c.l.b16 %v873
    %v1504 = vunpack.c.h.b16 %v873
    %v1505 = vunpack.c.l.b16 %v874
    %v1506 = vunpack.c.h.b16 %v874
    %v1507 = vunpack.c.l.b16 %v875
    %v1508 = vunpack.c.h.b16 %v875
    %v1509 = vunpack.c.l.b16 %v876
    %v1510 = vunpack.c.h.b16 %v876
    %v1511 = vunpack.c.l.b16 %v877
    %v1512 = vunpack.c.h.b16 %v877
    %v1513 = vunpack.c.l.b16 %v878
    %v1514 = vunpack.c.h.b16 %v878
    %v1515 = vunpack.c.l.b16 %v879
    %v1516 = vunpack.c.h.b16 %v879
    %v1517 = vunpack.c.l.b16 %v880
    %v1518 = vunpack.c.h.b16 %v880
    %v1519 = vunpack.c.l.b16 %v881
    %v1520 = vunpack.c.h.b16 %v881
    %v1521 = vunpack.c.l.b16 %v882
    %v1522 = vunpack.c.h.b16 %v882
    %v1523 = vunpack.c.l.b16 %v883
    %v1524 = vunpack.c.h.b16 %v883
    %v1525 = vunpack.c.l.b16 %v884
    %v1526 = vunpack.c.h.b16 %v884
    %v1527 = vunpack.c.l.b16 %v885
    %v1528 = vunpack.c.h.b16 %v885
    %v1529 = vunpack.c.l.b16 %v886
    %v1530 = vunpack.c.h.b16 %v886
    %v1531 = vunpack.c.l.b16 %v887
    %v1532 = vunpack.c.h.b16 %v887
    %v1533 = vunpack.c.l.b16 %v888
    %v1534 = vunpack.c.h.b16 %v888
    %v1535 = vunpack.c.l.b16 %v889
    %v1536 = vunpack.c.h.b16 %v889
    %v1537 = vunpack.c.l.b16 %v890
    %v1538 = vunpack.c.h.b16 %v890
    %v1539 = vunpack.c.l.b16 %v891
    %v1540 = vunpack.c.h.b16 %v891
    %v1541 = vunpack.c.l.b16 %v892
    %v1542 = vunpack.c.h.b16 %v892
    %v1543 = vunpack.c.l.b16 %v893
    %v1544 = vunpack.c.h.b16 %v893
    %v1545 = vunpack.c.l.b16 %v894
    %v1546 = vunpack.c.h.b16 %v894
    %v1547 = vunpack.c.l.b16 %v895
    %v1548 = vunpack.c.h.b16 %v895
    %v1549 = vunpack.c.l.b16 %v896
    %v1550 = vunpack.c.h.b16 %v896
    %v1551 = vunpack.c.l.b16 %v897
    %v1552 = vunpack.c.h.b16 %v897
    %v1553 = vunpack.c.l.b16 %v898
    %v1554 = vunpack.c.h.b16 %v898
    %v1555 = vunpack.c.l.b16 %v899
    %v1556 = vunpack.c.h.b16 %v899
    %v1557 = vunpack.c.l.b16 %v900
    %v1558 = vunpack.c.h.b16 %v900
    %v1559 = vunpack.c.l.b16 %v901
    %v1560 = vunpack.c.h.b16 %v901
    %v1561 = vunpack.c.l.b16 %v902
    %v1562 = vunpack.c.h.b16 %v902
    %v1563 = vunpack.c.l.b16 %v903
    %v1564 = vunpack.c.h.b16 %v903
    %v1565 = vunpack.c.l.b16 %v904
    %v1566 = vunpack.c.h.b16 %v904
    %v1567 = vunpack.c.l.b16 %v905
    %v1568 = vunpack.c.h.b16 %v905
    %v1569 = vunpack.c.l.b16 %v906
    %v1570 = vunpack.c.h.b16 %v906
    %v1571 = vunpack.c.l.b16 %v907
    %v1572 = vunpack.c.h.b16 %v907
    %v1573 = vunpack.c.l.b16 %v908
    %v1574 = vunpack.c.h.b16 %v908
    %v1575 = vunpack.c.l.b16 %v909
    %v1576 = vunpack.c.h.b16 %v909
    %v1577 = vunpack.c.l.b16 %v910
    %v1578 = vunpack.c.h.b16 %v910
    %v1579 = vunpack.c.l.b16 %v911
    %v1580 = vunpack.c.h.b16 %v911
    %v1581 = vunpack.c.l.b16 %v912
    %v1582 = vunpack.c.h.b16 %v912
    %v1583 = vunpack.c.l.b16 %v913
    %v1584 = vunpack.c.h.b16 %v913
    %v1585 = vunpack.c.l.b16 %v914
    %v1586 = vunpack.c.h.b16 %v914
    %v1587 = vunpack.c.l.b16 %v915
    %v1588 = vunpack.c.h.b16 %v915
    %v1589 = vunpack.c.l.b16 %v916
    %v1590 = vunpack.c.h.b16 %v916
    %v1591 = vunpack.c.l.b16 %v917
    %v1592 = vunpack.c.h.b16 %v917
    %v1593 = vunpack.c.l.b16 %v918
    %v1594 = vunpack.c.h.b16 %v918
    %v1595 = vunpack.c.l.b16 %v919
    %v1596 = vunpack.c.h.b16 %v919
    %v1597 = vunpack.c.l.b16 %v920
    %v1598 = vunpack.c.h.b16 %v920
    %v1599 = vunpack.c.l.b16 %v921
    %v1600 = vunpack.c.h.b16 %v921
    %v1601 = vunpack.c.l.b16 %v922
    %v1602 = vunpack.c.h.b16 %v922
    %v1603 = vunpack.c.l.b16 %v923
    %v1604 = vunpack.c.h.b16 %v923
    %v1605 = vunpack.c.l.b16 %v924
    %v1606 = vunpack.c.h.b16 %v924
    %v1607 = vunpack.c.l.b16 %v925
    %v1608 = vunpack.c.h.b16 %v925
    %v1609 = vunpack.c.l.b16 %v926
    %v1610 = vunpack.c.h.b16 %v926
    %v1611 = vunpack.c.l.b16 %v927
    %v1612 = vunpack.c.h.b16 %v927
    %v1613 = vunpack.c.l.b16 %v928
    %v1614 = vunpack.c.h.b16 %v928
    %v1615 = vunpack.c.l.b16 %v929
    %v1616 = vunpack.c.h.b16 %v929
    %v1617 = vunpack.c.l.b16 %v930
    %v1618 = vunpack.c.h.b16 %v930
    %v1619 = vunpack.c.l.b16 %v931
    %v1620 = vunpack.c.h.b16 %v931
    %v1621 = vunpack.c.l.b16 %v932
    %v1622 = vunpack.c.h.b16 %v932
    %v1623 = vunpack.c.l.b16 %v933
    %v1624 = vunpack.c.h.b16 %v933
    %v1625 = vunpack.c.l.b16 %v934
    %v1626 = vunpack.c.h.b16 %v934
    %v1627 = vunpack.c.l.b16 %v935
    %v1628 = vunpack.c.h.b16 %v935
    %v1629 = vunpack.c.l.b16 %v936
    %v1630 = vunpack.c.h.b16 %v936
    %v1631 = vunpack.c.l.b16 %v937
    %v1632 = vunpack.c.h.b16 %v937
    %v1633 = vunpack.c.l.b16 %v938
    %v1634 = vunpack.c.h.b16 %v938
    %v1635 = vunpack.c.l.b16 %v939
    %v1636 = vunpack.c.h.b16 %v939
    %v1637 = vunpack.c.l.b16 %v940
    %v1638 = vunpack.c.h.b16 %v940
    %v1639 = vunpack.c.l.b16 %v941
    %v1640 = vunpack.c.h.b16 %v941
    %v1641 = vunpack.c.l.b16 %v942
    %v1642 = vunpack.c.h.b16 %v942
    %v1643 = vunpack.c.l.b16 %v943
    %v1644 = vunpack.c.h.b16 %v943
    %v1645 = vunpack.c.l.b16 %v944
    %v1646 = vunpack.c.h.b16 %v944
    %v1647 = vunpack.c.l.b16 %v945
    %v1648 = vunpack.c.h.b16 %v945
    %v1649 = vunpack.c.l.b16 %v946
    %v1650 = vunpack.c.h.b16 %v946
    %v1651 = vunpack.c.l.b16 %v947
    %v1652 = vunpack.c.h.b16 %v947
    %v1653 = vunpack.c.l.b16 %v948
    %v1654 = vunpack.c.h.b16 %v948
    %v1655 = vunpack.c.l.b16 %v949
    %v1656 = vunpack.c.h.b16 %v949
    %v1657 = vunpack.c.l.b16 %v950
    %v1658 = vunpack.c.h.b16 %v950
    %v1659 = vunpack.c.l.b16 %v951
    %v1660 = vunpack.c.h.b16 %v951
    %v1661 = vunpack.c.l.b16 %v952
    %v1662 = vunpack.c.h.b16 %v952
    %v1663 = vunpack.c.l.b16 %v953
    %v1664 = vunpack.c.h.b16 %v953
    %v1665 = vunpack.c.l.b16 %v954
    %v1666 = vunpack.c.h.b16 %v954
    %v1667 = vunpack.c.l.b16 %v955
    %v1668 = vunpack.c.h.b16 %v955
    %v1669 = vunpack.c.l.b16 %v956
    %v1670 = vunpack.c.h.b16 %v956
    %v1671 = vunpack.c.l.b16 %v957
    %v1672 = vunpack.c.h.b16 %v957
    %v1673 = vunpack.c.l.b16 %v958
    %v1674 = vunpack.c.h.b16 %v958
    %v1675 = vunpack.c.l.b16 %v959
    %v1676 = vunpack.c.h.b16 %v959
    %v1677 = vunpack.c.l.b16 %v960
    %v1678 = vunpack.c.h.b16 %v960
    %v1679 = vunpack.c.l.b16 %v961
    %v1680 = vunpack.c.h.b16 %v961
    %v1681 = vunpack.c.l.b16 %v962
    %v1682 = vunpack.c.h.b16 %v962
    %v1683 = vunpack.c.l.b16 %v963
    %v1684 = vunpack.c.h.b16 %v963
    %v1685 = vunpack.c.l.b16 %v964
    %v1686 = vunpack.c.h.b16 %v964
    %v1687 = vunpack.c.l.b16 %v965
    %v1688 = vunpack.c.h.b16 %v965
    %v1689 = vunpack.c.l.b16 %v966
    %v1690 = vunpack.c.h.b16 %v966
    %v1691 = vunpack.c.l.b16 %v967
    %v1692 = vunpack.c.h.b16 %v967
    %v1693 = vunpack.c.l.b16 %v968
    %v1694 = vunpack.c.h.b16 %v968
    %v1695 = vunpack.c.l.b16 %v969
    %v1696 = vunpack.c.h.b16 %v969
    %v1697 = vunpack.c.l.b16 %v970
    %v1698 = vunpack.c.h.b16 %v970
    %v1699 = vunpack.c.l.b16 %v971
    %v1700 = vunpack.c.h.b16 %v971
    %v1701 = vunpack.c.l.b16 %v972
    %v1702 = vunpack.c.h.b16 %v972
    %v1703 = vunpack.c.l.b16 %v973
    %v1704 = vunpack.c.h.b16 %v973
    %v1705 = vunpack.c.l.b16 %v974
    %v1706 = vunpack.c.h.b16 %v974
    %v1707 = vunpack.c.l.b16 %v975
    %v1708 = vunpack.c.h.b16 %v975
    %v1709 = vunpack.c.l.b16 %v976
    %v1710 = vunpack.c.h.b16 %v976
    %v1711 = vunpack.c.l.b16 %v977
    %v1712 = vunpack.c.h.b16 %v977
    %v1713 = vunpack.c.l.b16 %v978
    %v1714 = vunpack.c.h.b16 %v978
    %v1715 = vunpack.c.l.b16 %v979
    %v1716 = vunpack.c.h.b16 %v979
    %v1717 = vunpack.c.l.b16 %v980
    %v1718 = vunpack.c.h.b16 %v980
    %v1719 = vunpack.c.l.b16 %v981
    %v1720 = vunpack.c.h.b16 %v981
    %v1721 = vunpack.c.l.b16 %v982
    %v1722 = vunpack.c.h.b16 %v982
    %v1723 = vunpack.c.l.b16 %v983
    %v1724 = vunpack.c.h.b16 %v983
    %v1725 = vunpack.c.l.b16 %v984
    %v1726 = vunpack.c.h.b16 %v984
    %v1727 = vunpack.c.l.b16 %v985
    %v1728 = vunpack.c.h.b16 %v985
    %v1729 = vunpack.c.l.b16 %v986
    %v1730 = vunpack.c.h.b16 %v986
    %v1731 = vunpack.c.l.b16 %v987
    %v1732 = vunpack.c.h.b16 %v987
    %v1733 = vunpack.c.l.b16 %v988
    %v1734 = vunpack.c.h.b16 %v988
    %v1735 = vunpack.c.l.b16 %v989
    %v1736 = vunpack.c.h.b16 %v989
    %v1737 = vunpack.c.l.b16 %v990
    %v1738 = vunpack.c.h.b16 %v990
    %v1739 = vunpack.c.l.b16 %v991
    %v1740 = vunpack.c.h.b16 %v991
    %v1741 = vunpack.c.l.b16 %v992
    %v1742 = vunpack.c.h.b16 %v992
    %v1743 = vunpack.c.l.b16 %v993
    %v1744 = vunpack.c.h.b16 %v993
    %v1745 = vunpack.c.l.b16 %v994
    %v1746 = vunpack.c.h.b16 %v994
    %v1747 = vunpack.c.l.b16 %v995
    %v1748 = vunpack.c.h.b16 %v995
    %v1749 = vunpack.c.l.b16 %v996
    %v1750 = vunpack.c.h.b16 %v996
    %v1751 = vunpack.c.l.b16 %v997
    %v1752 = vunpack.c.h.b16 %v997
    %v1753 = vunpack.c.l.b16 %v998
    %v1754 = vunpack.c.h.b16 %v998
    %v1755 = vunpack.c.l.b16 %v999
    %v1756 = vunpack.c.h.b16 %v999
    %v1757 = vunpack.c.l.b16 %v1000
    %v1758 = vunpack.c.h.b16 %v1000
    %v1759 = vunpack.c.l.b16 %v1001
    %v1760 = vunpack.c.h.b16 %v1001
    %v1761 = vunpack.c.l.b16 %v1002
    %v1762 = vunpack.c.h.b16 %v1002
    %v1763 = vunpack.c.l.b16 %v1003
    %v1764 = vunpack.c.h.b16 %v1003
    %v1765 = vunpack.c.l.b16 %v1004
    %v1766 = vunpack.c.h.b16 %v1004
    %v1767 = vunpack.c.l.b16 %v1005
    %v1768 = vunpack.c.h.b16 %v1005
    %v1769 = vunpack.c.l.b16 %v1006
    %v1770 = vunpack.c.h.b16 %v1006
    %v1771 = vunpack.c.l.b16 %v1007
    %v1772 = vunpack.c.h.b16 %v1007
    %v1773 = vunpack.c.l.b16 %v1008
    %v1774 = vunpack.c.h.b16 %v1008
    %v1775 = vunpack.c.l.b16 %v1009
    %v1776 = vunpack.c.h.b16 %v1009
    %v1777 = vunpack.c.l.b16 %v1010
    %v1778 = vunpack.c.h.b16 %v1010
    %v1779 = vunpack.c.l.b16 %v1011
    %v1780 = vunpack.c.h.b16 %v1011
    %v1781 = vunpack.c.l.b16 %v1012
    %v1782 = vunpack.c.h.b16 %v1012
    %v1783 = vunpack.c.l.b16 %v1013
    %v1784 = vunpack.c.h.b16 %v1013
    %v1785 = vunpack.c.l.b16 %v1014
    %v1786 = vunpack.c.h.b16 %v1014
    %v1787 = vunpack.c.l.b16 %v1015
    %v1788 = vunpack.c.h.b16 %v1015
    %v1789 = vunpack.c.l.b16 %v1016
    %v1790 = vunpack.c.h.b16 %v1016
    %v1791 = vunpack.c.l.b16 %v1017
    %v1792 = vunpack.c.h.b16 %v1017
    %v1793 = vunpack.c.l.b16 %v1018
    %v1794 = vunpack.c.h.b16 %v1018
    %v1795 = vunpack.c.l.b16 %v1019
    %v1796 = vunpack.c.h.b16 %v1019
    %v1797 = vunpack.c.l.b16 %v1020
    %v1798 = vunpack.c.h.b16 %v1020
    %v1799 = vunpack.c.l.b16 %v1021
    %v1800 = vunpack.c.h.b16 %v1021
    %v1801 = vunpack.c.l.b16 %v1022
    %v1802 = vunpack.c.h.b16 %v1022
    %v1803 = vunpack.c.l.b16 %v1023
    %v1804 = vunpack.c.h.b16 %v1023
    %v1805 = vunpack.c.l.b16 %v1024
    %v1806 = vunpack.c.h.b16 %v1024
    %v1807 = vunpack.c.l.b16 %v1025
    %v1808 = vunpack.c.h.b16 %v1025
    %v1809 = vunpack.c.l.b16 %v1026
    %v1810 = vunpack.c.h.b16 %v1026
    %v1811 = vunpack.c.l.b16 %v1027
    %v1812 = vunpack.c.h.b16 %v1027
    %v1813 = vunpack.c.l.b16 %v1028
    %v1814 = vunpack.c.h.b16 %v1028
    %v1815 = vunpack.c.l.b16 %v1029
    %v1816 = vunpack.c.h.b16 %v1029
    %v1817 = vunpack.c.l.b16 %v1030
    %v1818 = vunpack.c.h.b16 %v1030
    %v1819 = vunpack.c.l.b16 %v1031
    %v1820 = vunpack.c.h.b16 %v1031
    %v1821 = vunpack.c.l.b16 %v1032
    %v1822 = vunpack.c.h.b16 %v1032
    %v1823 = vunpack.c.l.b16 %v1033
    %v1824 = vunpack.c.h.b16 %v1033
    %v1825 = vunpack.c.l.b16 %v1034
    %v1826 = vunpack.c.h.b16 %v1034
    %v1827 = vunpack.c.l.b16 %v1035
    %v1828 = vunpack.c.h.b16 %v1035
    %v1829 = vunpack.c.l.b16 %v1036
    %v1830 = vunpack.c.h.b16 %v1036
    %v1831 = vunpack.c.l.b16 %v1037
    %v1832 = vunpack.c.h.b16 %v1037
    %v1833 = vunpack.c.l.b16 %v1038
    %v1834 = vunpack.c.h.b16 %v1038
    %v1835 = vunpack.c.l.b16 %v1039
    %v1836 = vunpack.c.h.b16 %v1039
    %v1837 = vunpack.c.l.b16 %v1040
    %v1838 = vunpack.c.h.b16 %v1040
    %v1839 = vunpack.c.l.b16 %v1041
    %v1840 = vunpack.c.h.b16 %v1041
    %v1841 = vunpack.c.l.b16 %v1042
    %v1842 = vunpack.c.h.b16 %v1042
    %v1843 = vunpack.c.l.b16 %v1043
    %v1844 = vunpack.c.h.b16 %v1043
    %v1845 = vunpack.c.l.b16 %v1044
    %v1846 = vunpack.c.h.b16 %v1044
    %v1847 = vunpack.c.l.b16 %v1045
    %v1848 = vunpack.c.h.b16 %v1045
    %v1849 = vunpack.c.l.b16 %v1046
    %v1850 = vunpack.c.h.b16 %v1046
    %v1851 = vunpack.c.l.b16 %v1047
    %v1852 = vunpack.c.h.b16 %v1047
    %v1853 = vunpack.c.l.b16 %v1048
    %v1854 = vunpack.c.h.b16 %v1048
    %v1855 = vunpack.c.l.b16 %v1049
    %v1856 = vunpack.c.h.b16 %v1049
    %v1857 = vunpack.c.l.b16 %v1050
    %v1858 = vunpack.c.h.b16 %v1050
    %v1859 = vunpack.c.l.b16 %v1051
    %v1860 = vunpack.c.h.b16 %v1051
    %v1861 = vunpack.c.l.b16 %v1052
    %v1862 = vunpack.c.h.b16 %v1052
    %v1863 = vpack.c.b16 %v1359, %v1351
    %v1864 = vpack.c.b16 %v1360, %v1352
    %v1865 = vpack.c.b16 %v1361, %v1353
    %v1866 = vpack.c.b16 %v1362, %v1354
    %v1867 = vpack.c.b16 %v1363, %v1355
    %v1868 = vpack.c.b16 %v1364, %v1356
    %v1869 = vpack.c.b16 %v1365, %v1357
    %v1870 = vpack.c.b16 %v1366, %v1358
    %v1871 = vpack.c.b16 %v1375, %v1367
    %v1872 = vpack.c.b16 %v1376, %v1368
    %v1873 = vpack.c.b16 %v1377, %v1369
    %v1874 = vpack.c.b16 %v1378, %v1370
    %v1875 = vpack.c.b16 %v1379, %v1371
    %v1876 = vpack.c.b16 %v1380, %v1372
    %v1877 = vpack.c.b16 %v1381, %v1373
    %v1878 = vpack.c.b16 %v1382, %v1374
    %v1879 = vpack.c.b16 %v1391, %v1383
    %v1880 = vpack.c.b16 %v1392, %v1384
    %v1881 = vpack.c.b16 %v1393, %v1385
    %v1882 = vpack.c.b16 %v1394, %v1386
    %v1883 = vpack.c.b16 %v1395, %v1387
    %v1884 = vpack.c.b16 %v1396, %v1388
    %v1885 = vpack.c.b16 %v1397, %v1389
    %v1886 = vpack.c.b16 %v1398, %v1390
    %v1887 = vpack.c.b16 %v1407, %v1399
    %v1888 = vpack.c.b16 %v1408, %v1400
    %v1889 = vpack.c.b16 %v1409, %v1401
    %v1890 = vpack.c.b16 %v1410, %v1402
    %v1891 = vpack.c.b16 %v1411, %v1403
    %v1892 = vpack.c.b16 %v1412, %v1404
    %v1893 = vpack.c.b16 %v1413, %v1405
    %v1894 = vpack.c.b16 %v1414, %v1406
    %v1895 = vpack.c.b16 %v1423, %v1415
    %v1896 = vpack.c.b16 %v1424, %v1416
    %v1897 = vpack.c.b16 %v1425, %v1417
    %v1898 = vpack.c.b16 %v1426, %v1418
    %v1899 = vpack.c.b16 %v1427, %v1419
    %v1900 = vpack.c.b16 %v1428, %v1420
    %v1901 = vpack.c.b16 %v1429, %v1421
    %v1902 = vpack.c.b16 %v1430, %v1422
    %v1903 = vpack.c.b16 %v1439, %v1431
    %v1904 = vpack.c.b16 %v1440, %v1432
    %v1905 = vpack.c.b16 %v1441, %v1433
    %v1906 = vpack.c.b16 %v1442, %v1434
    %v1907 = vpack.c.b16 %v1443, %v1435
    %v1908 = vpack.c.b16 %v1444, %v1436
    %v1909 = vpack.c.b16 %v1445, %v1437
    %v1910 = vpack.c.b16 %v1446, %v1438
    %v1911 = vpack.c.b16 %v1455, %v1447
    %v1912 = vpack.c.b16 %v1456, %v1448
    %v1913 = vpack.c.b16 %v1457, %v1449
    %v1914 = vpack.c.b16 %v1458, %v1450
    %v1915 = vpack.c.b16 %v1459, %v1451
    %v1916 = vpack.c.b16 %v1460, %v1452
    %v1917 = vpack.c.b16 %v1461, %v1453
    %v1918 = vpack.c.b16 %v1462, %v1454
    %v1919 = vpack.c.b16 %v1471, %v1463
    %v1920 = vpack.c.b16 %v1472, %v1464
    %v1921 = vpack.c.b16 %v1473, %v1465
    %v1922 = vpack.c.b16 %v1474, %v1466
    %v1923 = vpack.c.b16 %v1475, %v1467
    %v1924 = vpack.c.b16 %v1476, %v1468
    %v1925 = vpack.c.b16 %v1477, %v1469
    %v1926 = vpack.c.b16 %v1478, %v1470
    %v1927 = vpack.c.b16 %v1487, %v1479
    %v1928 = vpack.c.b16 %v1488, %v1480
    %v1929 = vpack.c.b16 %v1489, %v1481
    %v1930 = vpack.c.b16 %v1490, %v1482
    %v1931 = vpack.c.b16 %v1491, %v1483
    %v1932 = vpack.c.b16 %v1492, %v1484
    %v1933 = vpack.c.b16 %v1493, %v1485
    %v1934 = vpack.c.b16 %v1494, %v1486
    %v1935 = vpack.c.b16 %v1503, %v1495
    %v1936 = vpack.c.b16 %v1504, %v1496
    %v1937 = vpack.c.b16 %v1505, %v1497
    %v1938 = vpack.c.b16 %v1506, %v1498
    %v1939 = vpack.c.b16 %v1507, %v1499
    %v1940 = vpack.c.b16 %v1508, %v1500
    %v1941 = vpack.c.b16 %v1509, %v1501
    %v1942 = vpack.c.b16 %v1510, %v1502
    %v1943 = vpack.c.b16 %v1519, %v1511
    %v1944 = vpack.c.b16 %v1520, %v1512
    %v1945 = vpack.c.b16 %v1521, %v1513
    %v1946 = vpack.c.b16 %v1522, %v1514
    %v1947 = vpack.c.b16 %v1523, %v1515
    %v1948 = vpack.c.b16 %v1524, %v1516
    %v1949 = vpack.c.b16 %v1525, %v1517
    %v1950 = vpack.c.b16 %v1526, %v1518
    %v1951 = vpack.c.b16 %v1535, %v1527
    %v1952 = vpack.c.b16 %v1536, %v1528
    %v1953 = vpack.c.b16 %v1537, %v1529
    %v1954 = vpack.c.b16 %v1538, %v1530
    %v1955 = vpack.c.b16 %v1539, %v1531
    %v1956 = vpack.c.b16 %v1540, %v1532
    %v1957 = vpack.c.b16 %v1541, %v1533
    %v1958 = vpack.c.b16 %v1542, %v1534
    %v1959 = vpack.c.b16 %v1551, %v1543
    %v1960 = vpack.c.b16 %v1552, %v1544
    %v1961 = vpack.c.b16 %v1553, %v1545
    %v1962 = vpack.c.b16 %v1554, %v1546
    %v1963 = vpack.c.b16 %v1555, %v1547
    %v1964 = vpack.c.b16 %v1556, %v1548
    %v1965 = vpack.c.b16 %v1557, %v1549
    %v1966 = vpack.c.b16 %v1558, %v1550
    %v1967 = vpack.c.b16 %v1567, %v1559
    %v1968 = vpack.c.b16 %v1568, %v1560
    %v1969 = vpack.c.b16 %v1569, %v1561
    %v1970 = vpack.c.b16 %v1570, %v1562
    %v1971 = vpack.c.b16 %v1571, %v1563
    %v1972 = vpack.c.b16 %v1572, %v1564
    %v1973 = vpack.c.b16 %v1573, %v1565
    %v1974 = vpack.c.b16 %v1574, %v1566
    %v1975 = vpack.c.b16 %v1583, %v1575
    %v1976 = vpack.c.b16 %v1584, %v1576
    %v1977 = vpack.c.b16 %v1585, %v1577
    %v1978 = vpack.c.b16 %v1586, %v1578
    %v1979 = vpack.c.b16 %v1587, %v1579
    %v1980 = vpack.c.b16 %v1588, %v1580
    %v1981 = vpack.c.b16 %v1589, %v1581
    %v1982 = vpack.c.b16 %v1590, %v1582
    %v1983 = vpack.c.b16 %v1599, %v1591
    %v1984 = vpack.c.b16 %v1600, %v1592
    %v1985 = vpack.c.b16 %v1601, %v1593
    %v1986 = vpack.c.b16 %v1602, %v1594
    %v1987 = vpack.c.b16 %v1603, %v1595
    %v1988 = vpack.c.b16 %v1604, %v1596
    %v1989 = vpack.c.b16 %v1605, %v1597
    %v1990 = vpack.c.b16 %v1606, %v1598
    %v1991 = vpack.c.b16 %v1615, %v1607
    %v1992 = vpack.c.b16 %v1616, %v1608
    %v1993 = vpack.c.b16 %v1617, %v1609
    %v1994 = vpack.c.b16 %v1618, %v1610
    %v1995 = vpack.c.b16 %v1619, %v1611
    %v1996 = vpack.c.b16 %v1620, %v1612
    %v1997 = vpack.c.b16 %v1621, %v1613
    %v1998 = vpack.c.b16 %v1622, %v1614
    %v1999 = vpack.c.b16 %v1631, %v1623
    %v2000 = vpack.c.b16 %v1632, %v1624
    %v2001 = vpack.c.b16 %v1633, %v1625
    %v2002 = vpack.c.b16 %v1634, %v1626
    %v2003 = vpack.c.b16 %v1635, %v1627
    %v2004 = vpack.c.b16 %v1636, %v1628
    %v2005 = vpack.c.b16 %v1637, %v1629
    %v2006 = vpack.c.b16 %v1638, %v1630
    %v2007 = vpack.c.b16 %v1647, %v1639
    %v2008 = vpack.c.b16 %v1648, %v1640
    %v2009 = vpack.c.b16 %v1649, %v1641
    %v2010 = vpack.c.b16 %v1650, %v1642
    %v2011 = vpack.c.b16 %v1651, %v1643
    %v2012 = vpack.c.b16 %v1652, %v1644
    %v2013 = vpack.c.b16 %v1653, %v1645
    %v2014 = vpack.c.b16 %v1654, %v1646
    %v2015 = vpack.c.b16 %v1663, %v1655
    %v2016 = vpack.c.b16 %v1664, %v1656
    %v2017 = vpack.c.b16 %v1665, %v1657
    %v2018 = vpack.c.b16 %v1666, %v1658
    %v2019 = vpack.c.b16 %v1667, %v1659
    %v2020 = vpack.c.b16 %v1668, %v1660
    %v2021 = vpack.c.b16 %v1669, %v1661
    %v2022 = vpack.c.b16 %v1670, %v1662
    %v2023 = vpack.c.b16 %v1679, %v1671
    %v2024 = vpack.c.b16 %v1680, %v1672
    %v2025 = vpack.c.b16 %v1681, %v1673
    %v2026 = vpack.c.b16 %v1682, %v1674
    %v2027 = vpack.c.b16 %v1683, %v1675
    %v2028 = vpack.c.b16 %v1684, %v1676
    %v2029 = vpack.c.b16 %v1685, %v1677
    %v2030 = vpack.c.b16 %v1686, %v1678
    %v2031 = vpack.c.b16 %v1695, %v1687
    %v2032 = vpack.c.b16 %v1696, %v1688
    %v2033 = vpack.c.b16 %v1697, %v1689
    %v2034 = vpack.c.b16 %v1698, %v1690
    %v2035 = vpack.c.b16 %v1699, %v1691
    %v2036 = vpack.c.b16 %v1700, %v1692
    %v2037 = vpack.c.b16 %v1701, %v1693
    %v2038 = vpack.c.b16 %v1702, %v1694
    %v2039 = vpack.c.b16 %v1711, %v1703
    %v2040 = vpack.c.b16 %v1712, %v1704
    %v2041 = vpack.c.b16 %v1713, %v1705
    %v2042 = vpack.c.b16 %v1714, %v1706
    %v2043 = vpack.c.b16 %v1715, %v1707
    %v2044 = vpack.c.b16 %v1716, %v1708
    %v2045 = vpack.c.b16 %v1717, %v1709
    %v2046 = vpack.c.b16 %v1718, %v1710
    %v2047 = vpack.c.b16 %v1727, %v1719
    %v2048 = vpack.c.b16 %v1728, %v1720
    %v2049 = vpack.c.b16 %v1729, %v1721
    %v2050 = vpack.c.b16 %v1730, %v1722
    %v2051 = vpack.c.b16 %v1731, %v1723
    %v2052 = vpack.c.b16 %v1732, %v1724
    %v2053 = vpack.c.b16 %v1733, %v1725
    %v2054 = vpack.c.b16 %v1734, %v1726
    %v2055 = vpack.c.b16 %v1743, %v1735
    %v2056 = vpack.c.b16 %v1744, %v1736
    %v2057 = vpack.c.b16 %v1745, %v1737
    %v2058 = vpack.c.b16 %v1746, %v1738
    %v2059 = vpack.c.b16 %v1747, %v1739
    %v2060 = vpack.c.b16 %v1748, %v1740
    %v2061 = vpack.c.b16 %v1749, %v1741
    %v2062 = vpack.c.b16 %v1750, %v1742
    %v2063 = vpack.c.b16 %v1759, %v1751
    %v2064 = vpack.c.b16 %v1760, %v1752
    %v2065 = vpack.c.b16 %v1761, %v1753
    %v2066 = vpack.c.b16 %v1762, %v1754
    %v2067 = vpack.c.b16 %v1763, %v1755
    %v2068 = vpack.c.b16 %v1764, %v1756
    %v2069 = vpack.c.b16 %v1765, %v1757
    %v2070 = vpack.c.b16 %v1766, %v1758
    %v2071 = vpack.c.b16 %v1775, %v1767
    %v2072 = vpack.c.b16 %v1776, %v1768
    %v2073 = vpack.c.b16 %v1777, %v1769
    %v2074 = vpack.c.b16 %v1778, %v1770
    %v2075 = vpack.c.b16 %v1779, %v1771
    %v2076 = vpack.c.b16 %v1780, %v1772
    %v2077 = vpack.c.b16 %v1781, %v1773
    %v2078 = vpack.c.b16 %v1782, %v1774
    %v2079 = vpack.c.b16 %v1791, %v1783
    %v2080 = vpack.c.b16 %v1792, %v1784
    %v2081 = vpack.c.b16 %v1793, %v1785
    %v2082 = vpack.c.b16 %v1794, %v1786
    %v2083 = vpack.c.b16 %v1795, %v1787
    %v2084 = vpack.c.b16 %v1796, %v1788
    %v2085 = vpack.c.b16 %v1797, %v1789
    %v2086 = vpack.c.b16 %v1798, %v1790
    %v2087 = vpack.c.b16 %v1807, %v1799
    %v2088 = vpack.c.b16 %v1808, %v1800
    %v2089 = vpack.c.b16 %v1809, %v1801
    %v2090 = vpack.c.b16 %v1810, %v1802
    %v2091 = vpack.c.b16 %v1811, %v1803
    %v2092 = vpack.c.b16 %v1812, %v1804
    %v2093 = vpack.c.b16 %v1813, %v1805
    %v2094 = vpack.c.b16 %v1814, %v1806
    %v2095 = vpack.c.b16 %v1823, %v1815
    %v2096 = vpack.c.b16 %v1824, %v1816
    %v2097 = vpack.c.b16 %v1825, %v1817
    %v2098 = vpack.c.b16 %v1826, %v1818
    %v2099 = vpack.c.b16 %v1827, %v1819
    %v2100 = vpack.c.b16 %v1828, %v1820
    %v2101 = vpack.c.b16 %v1829, %v1821
    %v2102 = vpack.c.b16 %v1830, %v1822
    %v2103 = vpack.c.b16 %v1839, %v1831
    %v2104 = vpack.c.b16 %v1840, %v1832
    %v2105 = vpack.c.b16 %v1841, %v1833
    %v2106 = vpack.c.b16 %v1842, %v1834
    %v2107 = vpack.c.b16 %v1843, %v1835
    %v2108 = vpack.c.b16 %v1844, %v1836
    %v2109 = vpack.c.b16 %v1845, %v1837
    %v2110 = vpack.c.b16 %v1846, %v1838
    %v2111 = vpack.c.b16 %v1855, %v1847
    %v2112 = vpack.c.b16 %v1856, %v1848
    %v2113 = vpack.c.b16 %v1857, %v1849
    %v2114 = vpack.c.b16 %v1858, %v1850
    %v2115 = vpack.c.b16 %v1859, %v1851
    %v2116 = vpack.c.b16 %v1860, %v1852
    %v2117 = vpack.c.b16 %v1861, %v1853
    %v2118 = vpack.c.b16 %v1862, %v1854
    %2375 = vmatprep.subr.bf16.mxu0 %v1864
    %2376 = vmatpush1.bf16.msra.mxu0 %v1863
    %2377 = vmatprep.subr.bf16.mxu0 %v1872
    %2378 = vmatpush1.bf16.msra.mxu0 %v1871
    %2379 = vmatprep.subr.bf16.mxu0 %v1880
    %2380 = vmatpush1.bf16.msra.mxu0 %v1879
    %2381 = vmatprep.subr.bf16.mxu0 %v1888
    %2382 = vmatpush1.bf16.msra.mxu0 %v1887
    %2383 = vmatprep.subr.bf16.mxu0 %v1896
    %2384 = vmatpush1.bf16.msra.mxu0 %v1895
    %2385 = vmatprep.subr.bf16.mxu0 %v1904
    %2386 = vmatpush1.bf16.msra.mxu0 %v1903
    %2387 = vmatprep.subr.bf16.mxu0 %v1912
    %2388 = vmatpush1.bf16.msra.mxu0 %v1911
    %2389 = vmatprep.subr.bf16.mxu0 %v1920
    %2390 = vmatpush1.bf16.msra.mxu0 %v1919
    %2391 = vmatprep.subr.bf16.mxu0 %v1928
    %2392 = vmatpush1.bf16.msra.mxu0 %v1927
    %2393 = vmatprep.subr.bf16.mxu0 %v1936
    %2394 = vmatpush1.bf16.msra.mxu0 %v1935
    %2395 = vmatprep.subr.bf16.mxu0 %v1944
    %2396 = vmatpush1.bf16.msra.mxu0 %v1943
    %2397 = vmatprep.subr.bf16.mxu0 %v1952
    %2398 = vmatpush1.bf16.msra.mxu0 %v1951
    %2399 = vmatprep.subr.bf16.mxu0 %v1960
    %2400 = vmatpush1.bf16.msra.mxu0 %v1959
    %2401 = vmatprep.subr.bf16.mxu0 %v1968
    %2402 = vmatpush1.bf16.msra.mxu0 %v1967
    %2403 = vmatprep.subr.bf16.mxu0 %v1976
    %2404 = vmatpush1.bf16.msra.mxu0 %v1975
    %2405 = vmatprep.subr.bf16.mxu0 %v1984
    %2406 = vmatpush1.bf16.msra.mxu0 %v1983
    %2407 = vmatprep.mubr.bf16.mxu0 %v794
    %2408 = vmatmul.mubr.bf16.gmra.mrb[0].mxu0 %v793
    %v2409 = vpop.f32.mrb[0].mxu0
    %v2410 = vadd.f32 %v1058, %v2409
    %v2411 = vpop.f32.mrb[0].mxu0
    %v2412 = vadd.f32 %v1062, %v2411
    %v2413 = vpop.f32.mrb[0].mxu0
    %v2414 = vadd.f32 %v1058, %v2413
    %v2415 = vpop.f32.mrb[0].mxu0
    %v2416 = vadd.f32 %v1062, %v2415
    %2417 = vdwg.mxu0
    %2418 = vmatprep.subr.bf16.mxu0 %v1992
    %2419 = vmatpush1.bf16.msra.mxu0 %v1991
    %2420 = vmatprep.subr.bf16.mxu0 %v2000
    %2421 = vmatpush1.bf16.msra.mxu0 %v1999
    %2422 = vmatprep.subr.bf16.mxu0 %v2008
    %2423 = vmatpush1.bf16.msra.mxu0 %v2007
    %2424 = vmatprep.subr.bf16.mxu0 %v2016
    %2425 = vmatpush1.bf16.msra.mxu0 %v2015
    %2426 = vmatprep.subr.bf16.mxu0 %v2024
    %2427 = vmatpush1.bf16.msra.mxu0 %v2023
    %2428 = vmatprep.subr.bf16.mxu0 %v2032
    %2429 = vmatpush1.bf16.msra.mxu0 %v2031
    %2430 = vmatprep.subr.bf16.mxu0 %v2040
    %2431 = vmatpush1.bf16.msra.mxu0 %v2039
    %2432 = vmatprep.subr.bf16.mxu0 %v2048
    %2433 = vmatpush1.bf16.msra.mxu0 %v2047
    %2434 = vmatprep.subr.bf16.mxu0 %v2056
    %2435 = vmatpush1.bf16.msra.mxu0 %v2055
    %2436 = vmatprep.subr.bf16.mxu0 %v2064
    %2437 = vmatpush1.bf16.msra.mxu0 %v2063
    %2438 = vmatprep.subr.bf16.mxu0 %v2072
    %2439 = vmatpush1.bf16.msra.mxu0 %v2071
    %2440 = vmatprep.subr.bf16.mxu0 %v2080
    %2441 = vmatpush1.bf16.msra.mxu0 %v2079
    %2442 = vmatprep.subr.bf16.mxu0 %v2088
    %2443 = vmatpush1.bf16.msra.mxu0 %v2087
    %2444 = vmatprep.subr.bf16.mxu0 %v2096
    %2445 = vmatpush1.bf16.msra.mxu0 %v2095
    %2446 = vmatprep.subr.bf16.mxu0 %v2104
    %2447 = vmatpush1.bf16.msra.mxu0 %v2103
    %2448 = vmatprep.subr.bf16.mxu0 %v2112
    %2449 = vmatpush1.bf16.msra.mxu0 %v2111
    %2450 = vmatprep.mubr.bf16.mxu0 %v796
    %2451 = vmatmul.mubr.bf16.gmra.mrb[0].mxu0 %v795
    %v2452 = vpop.f32.mrb[0].mxu0
    %v2453 = vadd.f32 %v2410, %v2452
    %v2454 = vpop.f32.mrb[0].mxu0
    %v2455 = vadd.f32 %v2412, %v2454
    %v2456 = vpop.f32.mrb[0].mxu0
    %v2457 = vadd.f32 %v2414, %v2456
    %v2458 = vpop.f32.mrb[0].mxu0
    %v2459 = vadd.f32 %v2416, %v2458
    %2460 = vdwg.mxu0
    %2461 = vmatprep.subr.bf16.mxu0 %v1866
    %2462 = vmatpush1.bf16.msra.mxu0 %v1865
    %2463 = vmatprep.subr.bf16.mxu0 %v1874
    %2464 = vmatpush1.bf16.msra.mxu0 %v1873
    %2465 = vmatprep.subr.bf16.mxu0 %v1882
    %2466 = vmatpush1.bf16.msra.mxu0 %v1881
    %2467 = vmatprep.subr.bf16.mxu0 %v1890
    %2468 = vmatpush1.bf16.msra.mxu0 %v1889
    %2469 = vmatprep.subr.bf16.mxu0 %v1898
    %2470 = vmatpush1.bf16.msra.mxu0 %v1897
    %2471 = vmatprep.subr.bf16.mxu0 %v1906
    %2472 = vmatpush1.bf16.msra.mxu0 %v1905
    %2473 = vmatprep.subr.bf16.mxu0 %v1914
    %2474 = vmatpush1.bf16.msra.mxu0 %v1913
    %2475 = vmatprep.subr.bf16.mxu0 %v1922
    %2476 = vmatpush1.bf16.msra.mxu0 %v1921
    %2477 = vmatprep.subr.bf16.mxu0 %v1930
    %2478 = vmatpush1.bf16.msra.mxu0 %v1929
    %2479 = vmatprep.subr.bf16.mxu0 %v1938
    %2480 = vmatpush1.bf16.msra.mxu0 %v1937
    %2481 = vmatprep.subr.bf16.mxu0 %v1946
    %2482 = vmatpush1.bf16.msra.mxu0 %v1945
    %2483 = vmatprep.subr.bf16.mxu0 %v1954
    %2484 = vmatpush1.bf16.msra.mxu0 %v1953
    %2485 = vmatprep.subr.bf16.mxu0 %v1962
    %2486 = vmatpush1.bf16.msra.mxu0 %v1961
    %2487 = vmatprep.subr.bf16.mxu0 %v1970
    %2488 = vmatpush1.bf16.msra.mxu0 %v1969
    %2489 = vmatprep.subr.bf16.mxu0 %v1978
    %2490 = vmatpush1.bf16.msra.mxu0 %v1977
    %2491 = vmatprep.subr.bf16.mxu0 %v1986
    %2492 = vmatpush1.bf16.msra.mxu0 %v1985
    %2493 = vmatprep.mubr.bf16.mxu0 %v794
    %2494 = vmatmul.mubr.bf16.gmra.mrb[0].mxu0 %v793
    %v2495 = vpop.f32.mrb[0].mxu0
    %v2496 = vadd.f32 %v1066, %v2495
    %v2497 = vpop.f32.mrb[0].mxu0
    %v2498 = vadd.f32 %v1070, %v2497
    %v2499 = vpop.f32.mrb[0].mxu0
    %v2500 = vadd.f32 %v1066, %v2499
    %v2501 = vpop.f32.mrb[0].mxu0
    %v2502 = vadd.f32 %v1070, %v2501
    %2503 = vdwg.mxu0
    %2504 = vmatprep.subr.bf16.mxu0 %v1994
    %2505 = vmatpush1.bf16.msra.mxu0 %v1993
    %2506 = vmatprep.subr.bf16.mxu0 %v2002
    %2507 = vmatpush1.bf16.msra.mxu0 %v2001
    %2508 = vmatprep.subr.bf16.mxu0 %v2010
    %2509 = vmatpush1.bf16.msra.mxu0 %v2009
    %2510 = vmatprep.subr.bf16.mxu0 %v2018
    %2511 = vmatpush1.bf16.msra.mxu0 %v2017
    %2512 = vmatprep.subr.bf16.mxu0 %v2026
    %2513 = vmatpush1.bf16.msra.mxu0 %v2025
    %2514 = vmatprep.subr.bf16.mxu0 %v2034
    %2515 = vmatpush1.bf16.msra.mxu0 %v2033
    %2516 = vmatprep.subr.bf16.mxu0 %v2042
    %2517 = vmatpush1.bf16.msra.mxu0 %v2041
    %2518 = vmatprep.subr.bf16.mxu0 %v2050
    %2519 = vmatpush1.bf16.msra.mxu0 %v2049
    %2520 = vmatprep.subr.bf16.mxu0 %v2058
    %2521 = vmatpush1.bf16.msra.mxu0 %v2057
    %2522 = vmatprep.subr.bf16.mxu0 %v2066
    %2523 = vmatpush1.bf16.msra.mxu0 %v2065
    %2524 = vmatprep.subr.bf16.mxu0 %v2074
    %2525 = vmatpush1.bf16.msra.mxu0 %v2073
    %2526 = vmatprep.subr.bf16.mxu0 %v2082
    %2527 = vmatpush1.bf16.msra.mxu0 %v2081
    %2528 = vmatprep.subr.bf16.mxu0 %v2090
    %2529 = vmatpush1.bf16.msra.mxu0 %v2089
    %2530 = vmatprep.subr.bf16.mxu0 %v2098
    %2531 = vmatpush1.bf16.msra.mxu0 %v2097
    %2532 = vmatprep.subr.bf16.mxu0 %v2106
    %2533 = vmatpush1.bf16.msra.mxu0 %v2105
    %2534 = vmatprep.subr.bf16.mxu0 %v2114
    %2535 = vmatpush1.bf16.msra.mxu0 %v2113
    %2536 = vmatprep.mubr.bf16.mxu0 %v796
    %2537 = vmatmul.mubr.bf16.gmra.mrb[0].mxu0 %v795
    %v2538 = vpop.f32.mrb[0].mxu0
    %v2539 = vadd.f32 %v2496, %v2538
    %v2540 = vpop.f32.mrb[0].mxu0
    %v2541 = vadd.f32 %v2498, %v2540
    %v2542 = vpop.f32.mrb[0].mxu0
    %v2543 = vadd.f32 %v2500, %v2542
    %v2544 = vpop.f32.mrb[0].mxu0
    %v2545 = vadd.f32 %v2502, %v2544
    %2546 = vdwg.mxu0
    %2547 = vmatprep.subr.bf16.mxu0 %v1868
    %2548 = vmatpush1.bf16.msra.mxu0 %v1867
    %2549 = vmatprep.subr.bf16.mxu0 %v1876
    %2550 = vmatpush1.bf16.msra.mxu0 %v1875
    %2551 = vmatprep.subr.bf16.mxu0 %v1884
    %2552 = vmatpush1.bf16.msra.mxu0 %v1883
    %2553 = vmatprep.subr.bf16.mxu0 %v1892
    %2554 = vmatpush1.bf16.msra.mxu0 %v1891
    %2555 = vmatprep.subr.bf16.mxu0 %v1900
    %2556 = vmatpush1.bf16.msra.mxu0 %v1899
    %2557 = vmatprep.subr.bf16.mxu0 %v1908
    %2558 = vmatpush1.bf16.msra.mxu0 %v1907
    %2559 = vmatprep.subr.bf16.mxu0 %v1916
    %2560 = vmatpush1.bf16.msra.mxu0 %v1915
    %2561 = vmatprep.subr.bf16.mxu0 %v1924
    %2562 = vmatpush1.bf16.msra.mxu0 %v1923
    %2563 = vmatprep.subr.bf16.mxu0 %v1932
    %2564 = vmatpush1.bf16.msra.mxu0 %v1931
    %2565 = vmatprep.subr.bf16.mxu0 %v1940
    %2566 = vmatpush1.bf16.msra.mxu0 %v1939
    %2567 = vmatprep.subr.bf16.mxu0 %v1948
    %2568 = vmatpush1.bf16.msra.mxu0 %v1947
    %2569 = vmatprep.subr.bf16.mxu0 %v1956
    %2570 = vmatpush1.bf16.msra.mxu0 %v1955
    %2571 = vmatprep.subr.bf16.mxu0 %v1964
    %2572 = vmatpush1.bf16.msra.mxu0 %v1963
    %2573 = vmatprep.subr.bf16.mxu0 %v1972
    %2574 = vmatpush1.bf16.msra.mxu0 %v1971
    %2575 = vmatprep.subr.bf16.mxu0 %v1980
    %2576 = vmatpush1.bf16.msra.mxu0 %v1979
    %2577 = vmatprep.subr.bf16.mxu0 %v1988
    %2578 = vmatpush1.bf16.msra.mxu0 %v1987
    %2579 = vmatprep.mubr.bf16.mxu0 %v794
    %2580 = vmatmul.mubr.bf16.gmra.mrb[0].mxu0 %v793
    %v2581 = vpop.f32.mrb[0].mxu0
    %v2582 = vadd.f32 %v1074, %v2581
    %v2583 = vpop.f32.mrb[0].mxu0
    %v2584 = vadd.f32 %v1078, %v2583
    %v2585 = vpop.f32.mrb[0].mxu0
    %v2586 = vadd.f32 %v1074, %v2585
    %v2587 = vpop.f32.mrb[0].mxu0
    %v2588 = vadd.f32 %v1078, %v2587
    %2589 = vdwg.mxu0
    %2590 = vmatprep.subr.bf16.mxu0 %v1996
    %2591 = vmatpush1.bf16.msra.mxu0 %v1995
    %2592 = vmatprep.subr.bf16.mxu0 %v2004
    %2593 = vmatpush1.bf16.msra.mxu0 %v2003
    %2594 = vmatprep.subr.bf16.mxu0 %v2012
    %2595 = vmatpush1.bf16.msra.mxu0 %v2011
    %2596 = vmatprep.subr.bf16.mxu0 %v2020
    %2597 = vmatpush1.bf16.msra.mxu0 %v2019
    %2598 = vmatprep.subr.bf16.mxu0 %v2028
    %2599 = vmatpush1.bf16.msra.mxu0 %v2027
    %2600 = vmatprep.subr.bf16.mxu0 %v2036
    %2601 = vmatpush1.bf16.msra.mxu0 %v2035
    %2602 = vmatprep.subr.bf16.mxu0 %v2044
    %2603 = vmatpush1.bf16.msra.mxu0 %v2043
    %2604 = vmatprep.subr.bf16.mxu0 %v2052
    %2605 = vmatpush1.bf16.msra.mxu0 %v2051
    %2606 = vmatprep.subr.bf16.mxu0 %v2060
    %2607 = vmatpush1.bf16.msra.mxu0 %v2059
    %2608 = vmatprep.subr.bf16.mxu0 %v2068
    %2609 = vmatpush1.bf16.msra.mxu0 %v2067
    %2610 = vmatprep.subr.bf16.mxu0 %v2076
    %2611 = vmatpush1.bf16.msra.mxu0 %v2075
    %2612 = vmatprep.subr.bf16.mxu0 %v2084
    %2613 = vmatpush1.bf16.msra.mxu0 %v2083
    %2614 = vmatprep.subr.bf16.mxu0 %v2092
    %2615 = vmatpush1.bf16.msra.mxu0 %v2091
    %2616 = vmatprep.subr.bf16.mxu0 %v2100
    %2617 = vmatpush1.bf16.msra.mxu0 %v2099
    %2618 = vmatprep.subr.bf16.mxu0 %v2108
    %2619 = vmatpush1.bf16.msra.mxu0 %v2107
    %2620 = vmatprep.subr.bf16.mxu0 %v2116
    %2621 = vmatpush1.bf16.msra.mxu0 %v2115
    %2622 = vmatprep.mubr.bf16.mxu0 %v796
    %2623 = vmatmul.mubr.bf16.gmra.mrb[0].mxu0 %v795
    %v2624 = vpop.f32.mrb[0].mxu0
    %v2625 = vadd.f32 %v2582, %v2624
    %v2626 = vpop.f32.mrb[0].mxu0
    %v2627 = vadd.f32 %v2584, %v2626
    %v2628 = vpop.f32.mrb[0].mxu0
    %v2629 = vadd.f32 %v2586, %v2628
    %v2630 = vpop.f32.mrb[0].mxu0
    %v2631 = vadd.f32 %v2588, %v2630
    %2632 = vdwg.mxu0
    %2633 = vmatprep.subr.bf16.mxu0 %v1870
    %2634 = vmatpush1.bf16.msra.mxu0 %v1869
    %2635 = vmatprep.subr.bf16.mxu0 %v1878
    %2636 = vmatpush1.bf16.msra.mxu0 %v1877
    %2637 = vmatprep.subr.bf16.mxu0 %v1886
    %2638 = vmatpush1.bf16.msra.mxu0 %v1885
    %2639 = vmatprep.subr.bf16.mxu0 %v1894
    %2640 = vmatpush1.bf16.msra.mxu0 %v1893
    %2641 = vmatprep.subr.bf16.mxu0 %v1902
    %2642 = vmatpush1.bf16.msra.mxu0 %v1901
    %2643 = vmatprep.subr.bf16.mxu0 %v1910
    %2644 = vmatpush1.bf16.msra.mxu0 %v1909
    %2645 = vmatprep.subr.bf16.mxu0 %v1918
    %2646 = vmatpush1.bf16.msra.mxu0 %v1917
    %2647 = vmatprep.subr.bf16.mxu0 %v1926
    %2648 = vmatpush1.bf16.msra.mxu0 %v1925
    %2649 = vmatprep.subr.bf16.mxu0 %v1934
    %2650 = vmatpush1.bf16.msra.mxu0 %v1933
    %2651 = vmatprep.subr.bf16.mxu0 %v1942
    %2652 = vmatpush1.bf16.msra.mxu0 %v1941
    %2653 = vmatprep.subr.bf16.mxu0 %v1950
    %2654 = vmatpush1.bf16.msra.mxu0 %v1949
    %2655 = vmatprep.subr.bf16.mxu0 %v1958
    %2656 = vmatpush1.bf16.msra.mxu0 %v1957
    %2657 = vmatprep.subr.bf16.mxu0 %v1966
    %2658 = vmatpush1.bf16.msra.mxu0 %v1965
    %2659 = vmatprep.subr.bf16.mxu0 %v1974
    %2660 = vmatpush1.bf16.msra.mxu0 %v1973
    %2661 = vmatprep.subr.bf16.mxu0 %v1982
    %2662 = vmatpush1.bf16.msra.mxu0 %v1981
    %2663 = vmatprep.subr.bf16.mxu0 %v1990
    %2664 = vmatpush1.bf16.msra.mxu0 %v1989
    %2665 = vmatprep.mubr.bf16.mxu0 %v794
    %2666 = vmatmul.mubr.bf16.gmra.mrb[0].mxu0 %v793
    %v2667 = vpop.f32.mrb[0].mxu0
    %v2668 = vadd.f32 %v1082, %v2667
    %v2669 = vpop.f32.mrb[0].mxu0
    %v2670 = vadd.f32 %v1086, %v2669
    %v2671 = vpop.f32.mrb[0].mxu0
    %v2672 = vadd.f32 %v1082, %v2671
    %v2673 = vpop.f32.mrb[0].mxu0
    %v2674 = vadd.f32 %v1086, %v2673
    %2675 = vdwg.mxu0
    %2676 = vmatprep.subr.bf16.mxu0 %v1998
    %2677 = vmatpush1.bf16.msra.mxu0 %v1997
    %2678 = vmatprep.subr.bf16.mxu0 %v2006
    %2679 = vmatpush1.bf16.msra.mxu0 %v2005
    %2680 = vmatprep.subr.bf16.mxu0 %v2014
    %2681 = vmatpush1.bf16.msra.mxu0 %v2013
    %2682 = vmatprep.subr.bf16.mxu0 %v2022
    %2683 = vmatpush1.bf16.msra.mxu0 %v2021
    %2684 = vmatprep.subr.bf16.mxu0 %v2030
    %2685 = vmatpush1.bf16.msra.mxu0 %v2029
    %2686 = vmatprep.subr.bf16.mxu0 %v2038
    %2687 = vmatpush1.bf16.msra.mxu0 %v2037
    %2688 = vmatprep.subr.bf16.mxu0 %v2046
    %2689 = vmatpush1.bf16.msra.mxu0 %v2045
    %2690 = vmatprep.subr.bf16.mxu0 %v2054
    %2691 = vmatpush1.bf16.msra.mxu0 %v2053
    %2692 = vmatprep.subr.bf16.mxu0 %v2062
    %2693 = vmatpush1.bf16.msra.mxu0 %v2061
    %2694 = vmatprep.subr.bf16.mxu0 %v2070
    %2695 = vmatpush1.bf16.msra.mxu0 %v2069
    %2696 = vmatprep.subr.bf16.mxu0 %v2078
    %2697 = vmatpush1.bf16.msra.mxu0 %v2077
    %2698 = vmatprep.subr.bf16.mxu0 %v2086
    %2699 = vmatpush1.bf16.msra.mxu0 %v2085
    %2700 = vmatprep.subr.bf16.mxu0 %v2094
    %2701 = vmatpush1.bf16.msra.mxu0 %v2093
    %2702 = vmatprep.subr.bf16.mxu0 %v2102
    %2703 = vmatpush1.bf16.msra.mxu0 %v2101
    %2704 = vmatprep.subr.bf16.mxu0 %v2110
    %2705 = vmatpush1.bf16.msra.mxu0 %v2109
    %2706 = vmatprep.subr.bf16.mxu0 %v2118
    %2707 = vmatpush1.bf16.msra.mxu0 %v2117
    %2708 = vmatprep.mubr.bf16.mxu0 %v796
    %2709 = vmatmul.mubr.bf16.gmra.mrb[0].mxu0 %v795
    %v2710 = vpop.f32.mrb[0].mxu0
    %v2711 = vadd.f32 %v2668, %v2710
    %v2712 = vpop.f32.mrb[0].mxu0
    %v2713 = vadd.f32 %v2670, %v2712
    %v2714 = vpop.f32.mrb[0].mxu0
    %v2715 = vadd.f32 %v2672, %v2714
    %v2716 = vpop.f32.mrb[0].mxu0
    %v2717 = vadd.f32 %v2674, %v2716
    %2718 = vdwg.mxu0
    %vm2719 = vcmp.gt.f32.partialorder %v2453, 0.0
    %vm2720 = vcmp.gt.f32.partialorder %v2455, 0.0
    %vm2721 = vcmp.gt.f32.partialorder %v2539, 0.0
    %vm2722 = vcmp.gt.f32.partialorder %v2541, 0.0
    %vm2723 = vcmp.gt.f32.partialorder %v2625, 0.0
    %vm2724 = vcmp.gt.f32.partialorder %v2627, 0.0
    %vm2725 = vcmp.gt.f32.partialorder %v2711, 0.0
    %vm2726 = vcmp.gt.f32.partialorder %v2713, 0.0
    %vm2727 = vcmp.gt.f32.partialorder %v2457, 0.0
    %vm2728 = vcmp.gt.f32.partialorder %v2459, 0.0
    %vm2729 = vcmp.gt.f32.partialorder %v2543, 0.0
    %vm2730 = vcmp.gt.f32.partialorder %v2545, 0.0
    %vm2731 = vcmp.gt.f32.partialorder %v2629, 0.0
    %vm2732 = vcmp.gt.f32.partialorder %v2631, 0.0
    %vm2733 = vcmp.gt.f32.partialorder %v2715, 0.0
    %vm2734 = vcmp.gt.f32.partialorder %v2717, 0.0
    %v2735 = vmul.f32 %v2453, 0.01
    %v2736 = vmul.f32 %v2455, 0.01
    %v2737 = vmul.f32 %v2539, 0.01
    %v2738 = vmul.f32 %v2541, 0.01
    %v2739 = vmul.f32 %v2625, 0.01
    %v2740 = vmul.f32 %v2627, 0.01
    %v2741 = vmul.f32 %v2711, 0.01
    %v2742 = vmul.f32 %v2713, 0.01
    %v2743 = vmul.f32 %v2457, 0.01
    %v2744 = vmul.f32 %v2459, 0.01
    %v2745 = vmul.f32 %v2543, 0.01
    %v2746 = vmul.f32 %v2545, 0.01
    %v2747 = vmul.f32 %v2629, 0.01
    %v2748 = vmul.f32 %v2631, 0.01
    %v2749 = vmul.f32 %v2715, 0.01
    %v2750 = vmul.f32 %v2717, 0.01
    %v2751 = vsel %vm2719, %v2453, %v2735
    %v2752 = vsel %vm2720, %v2455, %v2736
    %v2753 = vsel %vm2721, %v2539, %v2737
    %v2754 = vsel %vm2722, %v2541, %v2738
    %v2755 = vsel %vm2723, %v2625, %v2739
    %v2756 = vsel %vm2724, %v2627, %v2740
    %v2757 = vsel %vm2725, %v2711, %v2741
    %v2758 = vsel %vm2726, %v2713, %v2742
    %v2759 = vsel %vm2727, %v2457, %v2743
    %v2760 = vsel %vm2728, %v2459, %v2744
    %v2761 = vsel %vm2729, %v2543, %v2745
    %v2762 = vsel %vm2730, %v2545, %v2746
    %v2763 = vsel %vm2731, %v2629, %v2747
    %v2764 = vsel %vm2732, %v2631, %v2748
    %v2765 = vsel %vm2733, %v2715, %v2749
    %v2766 = vsel %vm2734, %v2717, %v2750
    %v2767 = vpack.c.bf16 %v2759, %v2751
    %v2768 = vpack.c.bf16 %v2760, %v2752
    %v2769 = vpack.c.bf16 %v2761, %v2753
    %v2770 = vpack.c.bf16 %v2762, %v2754
    %v2771 = vpack.c.bf16 %v2763, %v2755
    %v2772 = vpack.c.bf16 %v2764, %v2756
    %v2773 = vpack.c.bf16 %v2765, %v2757
    %v2774 = vpack.c.bf16 %v2766, %v2758
    %v2775 = vld [vmem:[%s8] sm:$0xf]
    %v2776 = vld [vmem:[%s8 + $0x4] sm:$0xf]
    %v2777 = vld [vmem:[%s8 + $0x8] sm:$0xf]
    %v2778 = vld [vmem:[%s8 + $0xc] sm:$0xf]
    %v2779 = vld [vmem:[%s8 + $0x10] sm:$0xf]
    %v2780 = vld [vmem:[%s8 + $0x14] sm:$0xf]
    %v2781 = vld [vmem:[%s8 + $0x18] sm:$0xf]
    %v2782 = vld [vmem:[%s8 + $0x1c] sm:$0xf]
    %v2783 = vld [vmem:[%s8 + $0x20] sm:$0xf]
    %v2784 = vld [vmem:[%s8 + $0x24] sm:$0xf]
    %v2785 = vld [vmem:[%s8 + $0x28] sm:$0xf]
    %v2786 = vld [vmem:[%s8 + $0x2c] sm:$0xf]
    %v2787 = vld [vmem:[%s8 + $0x30] sm:$0xf]
    %v2788 = vld [vmem:[%s8 + $0x34] sm:$0xf]
    %v2789 = vld [vmem:[%s8 + $0x38] sm:$0xf]
    %v2790 = vld [vmem:[%s8 + $0x3c] sm:$0xf]
    %v2791 = vld [vmem:[%s8 + $0x40] sm:$0xf]
    %v2792 = vld [vmem:[%s8 + $0x44] sm:$0xf]
    %v2793 = vld [vmem:[%s8 + $0x48] sm:$0xf]
    %v2794 = vld [vmem:[%s8 + $0x4c] sm:$0xf]
    %v2795 = vld [vmem:[%s8 + $0x50] sm:$0xf]
    %v2796 = vld [vmem:[%s8 + $0x54] sm:$0xf]
    %v2797 = vld [vmem:[%s8 + $0x58] sm:$0xf]
    %v2798 = vld [vmem:[%s8 + $0x5c] sm:$0xf]
    %v2799 = vld [vmem:[%s8 + $0x60] sm:$0xf]
    %v2800 = vld [vmem:[%s8 + $0x64] sm:$0xf]
    %v2801 = vld [vmem:[%s8 + $0x68] sm:$0xf]
    %v2802 = vld [vmem:[%s8 + $0x6c] sm:$0xf]
    %v2803 = vld [vmem:[%s8 + $0x70] sm:$0xf]
    %v2804 = vld [vmem:[%s8 + $0x74] sm:$0xf]
    %v2805 = vld [vmem:[%s8 + $0x78] sm:$0xf]
    %v2806 = vld [vmem:[%s8 + $0x7c] sm:$0xf]
    %v2807 = vld [vmem:[%s8 + $0x80] sm:$0xf]
    %v2808 = vld [vmem:[%s8 + $0x84] sm:$0xf]
    %v2809 = vld [vmem:[%s8 + $0x88] sm:$0xf]
    %v2810 = vld [vmem:[%s8 + $0x8c] sm:$0xf]
    %v2811 = vld [vmem:[%s8 + $0x90] sm:$0xf]
    %v2812 = vld [vmem:[%s8 + $0x94] sm:$0xf]
    %v2813 = vld [vmem:[%s8 + $0x98] sm:$0xf]
    %v2814 = vld [vmem:[%s8 + $0x9c] sm:$0xf]
    %v2815 = vld [vmem:[%s8 + $0xa0] sm:$0xf]
    %v2816 = vld [vmem:[%s8 + $0xa4] sm:$0xf]
    %v2817 = vld [vmem:[%s8 + $0xa8] sm:$0xf]
    %v2818 = vld [vmem:[%s8 + $0xac] sm:$0xf]
    %v2819 = vld [vmem:[%s8 + $0xb0] sm:$0xf]
    %v2820 = vld [vmem:[%s8 + $0xb4] sm:$0xf]
    %v2821 = vld [vmem:[%s8 + $0xb8] sm:$0xf]
    %v2822 = vld [vmem:[%s8 + $0xbc] sm:$0xf]
    %v2823 = vld [vmem:[%s8 + $0xc0] sm:$0xf]
    %v2824 = vld [vmem:[%s8 + $0xc4] sm:$0xf]
    %v2825 = vld [vmem:[%s8 + $0xc8] sm:$0xf]
    %v2826 = vld [vmem:[%s8 + $0xcc] sm:$0xf]
    %v2827 = vld [vmem:[%s8 + $0xd0] sm:$0xf]
    %v2828 = vld [vmem:[%s8 + $0xd4] sm:$0xf]
    %v2829 = vld [vmem:[%s8 + $0xd8] sm:$0xf]
    %v2830 = vld [vmem:[%s8 + $0xdc] sm:$0xf]
    %v2831 = vld [vmem:[%s8 + $0xe0] sm:$0xf]
    %v2832 = vld [vmem:[%s8 + $0xe4] sm:$0xf]
    %v2833 = vld [vmem:[%s8 + $0xe8] sm:$0xf]
    %v2834 = vld [vmem:[%s8 + $0xec] sm:$0xf]
    %v2835 = vld [vmem:[%s8 + $0xf0] sm:$0xf]
    %v2836 = vld [vmem:[%s8 + $0xf4] sm:$0xf]
    %v2837 = vld [vmem:[%s8 + $0xf8] sm:$0xf]
    %v2838 = vld [vmem:[%s8 + $0xfc] sm:$0xf]
    %v2839 = vld [vmem:[%s8 + $0x100] sm:$0xf]
    %v2840 = vld [vmem:[%s8 + $0x104] sm:$0xf]
    %v2841 = vld [vmem:[%s8 + $0x108] sm:$0xf]
    %v2842 = vld [vmem:[%s8 + $0x10c] sm:$0xf]
    %v2843 = vld [vmem:[%s8 + $0x110] sm:$0xf]
    %v2844 = vld [vmem:[%s8 + $0x114] sm:$0xf]
    %v2845 = vld [vmem:[%s8 + $0x118] sm:$0xf]
    %v2846 = vld [vmem:[%s8 + $0x11c] sm:$0xf]
    %v2847 = vld [vmem:[%s8 + $0x120] sm:$0xf]
    %v2848 = vld [vmem:[%s8 + $0x124] sm:$0xf]
    %v2849 = vld [vmem:[%s8 + $0x128] sm:$0xf]
    %v2850 = vld [vmem:[%s8 + $0x12c] sm:$0xf]
    %v2851 = vld [vmem:[%s8 + $0x130] sm:$0xf]
    %v2852 = vld [vmem:[%s8 + $0x134] sm:$0xf]
    %v2853 = vld [vmem:[%s8 + $0x138] sm:$0xf]
    %v2854 = vld [vmem:[%s8 + $0x13c] sm:$0xf]
    %v2855 = vld [vmem:[%s8 + $0x140] sm:$0xf]
    %v2856 = vld [vmem:[%s8 + $0x144] sm:$0xf]
    %v2857 = vld [vmem:[%s8 + $0x148] sm:$0xf]
    %v2858 = vld [vmem:[%s8 + $0x14c] sm:$0xf]
    %v2859 = vld [vmem:[%s8 + $0x150] sm:$0xf]
    %v2860 = vld [vmem:[%s8 + $0x154] sm:$0xf]
    %v2861 = vld [vmem:[%s8 + $0x158] sm:$0xf]
    %v2862 = vld [vmem:[%s8 + $0x15c] sm:$0xf]
    %v2863 = vld [vmem:[%s8 + $0x160] sm:$0xf]
    %v2864 = vld [vmem:[%s8 + $0x164] sm:$0xf]
    %v2865 = vld [vmem:[%s8 + $0x168] sm:$0xf]
    %v2866 = vld [vmem:[%s8 + $0x16c] sm:$0xf]
    %v2867 = vld [vmem:[%s8 + $0x170] sm:$0xf]
    %v2868 = vld [vmem:[%s8 + $0x174] sm:$0xf]
    %v2869 = vld [vmem:[%s8 + $0x178] sm:$0xf]
    %v2870 = vld [vmem:[%s8 + $0x17c] sm:$0xf]
    %v2871 = vld [vmem:[%s8 + $0x180] sm:$0xf]
    %v2872 = vld [vmem:[%s8 + $0x184] sm:$0xf]
    %v2873 = vld [vmem:[%s8 + $0x188] sm:$0xf]
    %v2874 = vld [vmem:[%s8 + $0x18c] sm:$0xf]
    %v2875 = vld [vmem:[%s8 + $0x190] sm:$0xf]
    %v2876 = vld [vmem:[%s8 + $0x194] sm:$0xf]
    %v2877 = vld [vmem:[%s8 + $0x198] sm:$0xf]
    %v2878 = vld [vmem:[%s8 + $0x19c] sm:$0xf]
    %v2879 = vld [vmem:[%s8 + $0x1a0] sm:$0xf]
    %v2880 = vld [vmem:[%s8 + $0x1a4] sm:$0xf]
    %v2881 = vld [vmem:[%s8 + $0x1a8] sm:$0xf]
    %v2882 = vld [vmem:[%s8 + $0x1ac] sm:$0xf]
    %v2883 = vld [vmem:[%s8 + $0x1b0] sm:$0xf]
    %v2884 = vld [vmem:[%s8 + $0x1b4] sm:$0xf]
    %v2885 = vld [vmem:[%s8 + $0x1b8] sm:$0xf]
    %v2886 = vld [vmem:[%s8 + $0x1bc] sm:$0xf]
    %v2887 = vld [vmem:[%s8 + $0x1c0] sm:$0xf]
    %v2888 = vld [vmem:[%s8 + $0x1c4] sm:$0xf]
    %v2889 = vld [vmem:[%s8 + $0x1c8] sm:$0xf]
    %v2890 = vld [vmem:[%s8 + $0x1cc] sm:$0xf]
    %v2891 = vld [vmem:[%s8 + $0x1d0] sm:$0xf]
    %v2892 = vld [vmem:[%s8 + $0x1d4] sm:$0xf]
    %v2893 = vld [vmem:[%s8 + $0x1d8] sm:$0xf]
    %v2894 = vld [vmem:[%s8 + $0x1dc] sm:$0xf]
    %v2895 = vld [vmem:[%s8 + $0x1e0] sm:$0xf]
    %v2896 = vld [vmem:[%s8 + $0x1e4] sm:$0xf]
    %v2897 = vld [vmem:[%s8 + $0x1e8] sm:$0xf]
    %v2898 = vld [vmem:[%s8 + $0x1ec] sm:$0xf]
    %v2899 = vld [vmem:[%s8 + $0x1f0] sm:$0xf]
    %v2900 = vld [vmem:[%s8 + $0x1f4] sm:$0xf]
    %v2901 = vld [vmem:[%s8 + $0x1f8] sm:$0xf]
    %v2902 = vld [vmem:[%s8 + $0x1fc] sm:$0xf]
    %v2903 = vld [vmem:[%s9] sm:$0x1]
    %v2905 = vlaneseq
    %v2906 = vshrl.u32 %v2905, 7
    %v2907 = vsub.s32 0, %v2906
    %v2908 = vrot.slane %v2903, %v2907
    %v3038 = vunpack.c.l.b16 %v2775
    %v3039 = vunpack.c.l.b16 %v2776
    %v3040 = vunpack.c.l.b16 %v2777
    %v3041 = vunpack.c.l.b16 %v2778
    %v3042 = vunpack.c.l.b16 %v2779
    %v3043 = vunpack.c.l.b16 %v2780
    %v3044 = vunpack.c.l.b16 %v2781
    %v3045 = vunpack.c.l.b16 %v2782
    %v3046 = vunpack.c.l.b16 %v2783
    %v3047 = vunpack.c.l.b16 %v2784
    %v3048 = vunpack.c.l.b16 %v2785
    %v3049 = vunpack.c.l.b16 %v2786
    %v3050 = vunpack.c.l.b16 %v2787
    %v3051 = vunpack.c.l.b16 %v2788
    %v3052 = vunpack.c.l.b16 %v2789
    %v3053 = vunpack.c.l.b16 %v2790
    %v3054 = vunpack.c.l.b16 %v2791
    %v3055 = vunpack.c.l.b16 %v2792
    %v3056 = vunpack.c.l.b16 %v2793
    %v3057 = vunpack.c.l.b16 %v2794
    %v3058 = vunpack.c.l.b16 %v2795
    %v3059 = vunpack.c.l.b16 %v2796
    %v3060 = vunpack.c.l.b16 %v2797
    %v3061 = vunpack.c.l.b16 %v2798
    %v3062 = vunpack.c.l.b16 %v2799
    %v3063 = vunpack.c.l.b16 %v2800
    %v3064 = vunpack.c.l.b16 %v2801
    %v3065 = vunpack.c.l.b16 %v2802
    %v3066 = vunpack.c.l.b16 %v2803
    %v3067 = vunpack.c.l.b16 %v2804
    %v3068 = vunpack.c.l.b16 %v2805
    %v3069 = vunpack.c.l.b16 %v2806
    %v3070 = vunpack.c.l.b16 %v2807
    %v3071 = vunpack.c.l.b16 %v2808
    %v3072 = vunpack.c.l.b16 %v2809
    %v3073 = vunpack.c.l.b16 %v2810
    %v3074 = vunpack.c.l.b16 %v2811
    %v3075 = vunpack.c.l.b16 %v2812
    %v3076 = vunpack.c.l.b16 %v2813
    %v3077 = vunpack.c.l.b16 %v2814
    %v3078 = vunpack.c.l.b16 %v2815
    %v3079 = vunpack.c.l.b16 %v2816
    %v3080 = vunpack.c.l.b16 %v2817
    %v3081 = vunpack.c.l.b16 %v2818
    %v3082 = vunpack.c.l.b16 %v2819
    %v3083 = vunpack.c.l.b16 %v2820
    %v3084 = vunpack.c.l.b16 %v2821
    %v3085 = vunpack.c.l.b16 %v2822
    %v3086 = vunpack.c.l.b16 %v2823
    %v3087 = vunpack.c.l.b16 %v2824
    %v3088 = vunpack.c.l.b16 %v2825
    %v3089 = vunpack.c.l.b16 %v2826
    %v3090 = vunpack.c.l.b16 %v2827
    %v3091 = vunpack.c.l.b16 %v2828
    %v3092 = vunpack.c.l.b16 %v2829
    %v3093 = vunpack.c.l.b16 %v2830
    %v3094 = vunpack.c.l.b16 %v2831
    %v3095 = vunpack.c.l.b16 %v2832
    %v3096 = vunpack.c.l.b16 %v2833
    %v3097 = vunpack.c.l.b16 %v2834
    %v3098 = vunpack.c.l.b16 %v2835
    %v3099 = vunpack.c.l.b16 %v2836
    %v3100 = vunpack.c.l.b16 %v2837
    %v3101 = vunpack.c.l.b16 %v2838
    %v3102 = vunpack.c.l.b16 %v2839
    %v3103 = vunpack.c.l.b16 %v2840
    %v3104 = vunpack.c.l.b16 %v2841
    %v3105 = vunpack.c.l.b16 %v2842
    %v3106 = vunpack.c.l.b16 %v2843
    %v3107 = vunpack.c.l.b16 %v2844
    %v3108 = vunpack.c.l.b16 %v2845
    %v3109 = vunpack.c.l.b16 %v2846
    %v3110 = vunpack.c.l.b16 %v2847
    %v3111 = vunpack.c.l.b16 %v2848
    %v3112 = vunpack.c.l.b16 %v2849
    %v3113 = vunpack.c.l.b16 %v2850
    %v3114 = vunpack.c.l.b16 %v2851
    %v3115 = vunpack.c.l.b16 %v2852
    %v3116 = vunpack.c.l.b16 %v2853
    %v3117 = vunpack.c.l.b16 %v2854
    %v3118 = vunpack.c.l.b16 %v2855
    %v3119 = vunpack.c.l.b16 %v2856
    %v3120 = vunpack.c.l.b16 %v2857
    %v3121 = vunpack.c.l.b16 %v2858
    %v3122 = vunpack.c.l.b16 %v2859
    %v3123 = vunpack.c.l.b16 %v2860
    %v3124 = vunpack.c.l.b16 %v2861
    %v3125 = vunpack.c.l.b16 %v2862
    %v3126 = vunpack.c.l.b16 %v2863
    %v3127 = vunpack.c.l.b16 %v2864
    %v3128 = vunpack.c.l.b16 %v2865
    %v3129 = vunpack.c.l.b16 %v2866
    %v3130 = vunpack.c.l.b16 %v2867
    %v3131 = vunpack.c.l.b16 %v2868
    %v3132 = vunpack.c.l.b16 %v2869
    %v3133 = vunpack.c.l.b16 %v2870
    %v3134 = vunpack.c.l.b16 %v2871
    %v3135 = vunpack.c.l.b16 %v2872
    %v3136 = vunpack.c.l.b16 %v2873
    %v3137 = vunpack.c.l.b16 %v2874
    %v3138 = vunpack.c.l.b16 %v2875
    %v3139 = vunpack.c.l.b16 %v2876
    %v3140 = vunpack.c.l.b16 %v2877
    %v3141 = vunpack.c.l.b16 %v2878
    %v3142 = vunpack.c.l.b16 %v2879
    %v3143 = vunpack.c.l.b16 %v2880
    %v3144 = vunpack.c.l.b16 %v2881
    %v3145 = vunpack.c.l.b16 %v2882
    %v3146 = vunpack.c.l.b16 %v2883
    %v3147 = vunpack.c.l.b16 %v2884
    %v3148 = vunpack.c.l.b16 %v2885
    %v3149 = vunpack.c.l.b16 %v2886
    %v3150 = vunpack.c.l.b16 %v2887
    %v3151 = vunpack.c.l.b16 %v2888
    %v3152 = vunpack.c.l.b16 %v2889
    %v3153 = vunpack.c.l.b16 %v2890
    %v3154 = vunpack.c.l.b16 %v2891
    %v3155 = vunpack.c.l.b16 %v2892
    %v3156 = vunpack.c.l.b16 %v2893
    %v3157 = vunpack.c.l.b16 %v2894
    %v3158 = vunpack.c.l.b16 %v2895
    %v3159 = vunpack.c.l.b16 %v2896
    %v3160 = vunpack.c.l.b16 %v2897
    %v3161 = vunpack.c.l.b16 %v2898
    %v3162 = vunpack.c.l.b16 %v2899
    %v3163 = vunpack.c.l.b16 %v2900
    %v3164 = vunpack.c.l.b16 %v2901
    %v3165 = vunpack.c.l.b16 %v2902
    %v3166 = vpack.c.b16 %v3039, %v3038
    %v3167 = vpack.c.b16 %v3041, %v3040
    %v3168 = vpack.c.b16 %v3043, %v3042
    %v3169 = vpack.c.b16 %v3045, %v3044
    %v3170 = vpack.c.b16 %v3047, %v3046
    %v3171 = vpack.c.b16 %v3049, %v3048
    %v3172 = vpack.c.b16 %v3051, %v3050
    %v3173 = vpack.c.b16 %v3053, %v3052
    %v3174 = vpack.c.b16 %v3055, %v3054
    %v3175 = vpack.c.b16 %v3057, %v3056
    %v3176 = vpack.c.b16 %v3059, %v3058
    %v3177 = vpack.c.b16 %v3061, %v3060
    %v3178 = vpack.c.b16 %v3063, %v3062
    %v3179 = vpack.c.b16 %v3065, %v3064
    %v3180 = vpack.c.b16 %v3067, %v3066
    %v3181 = vpack.c.b16 %v3069, %v3068
    %v3182 = vpack.c.b16 %v3071, %v3070
    %v3183 = vpack.c.b16 %v3073, %v3072
    %v3184 = vpack.c.b16 %v3075, %v3074
    %v3185 = vpack.c.b16 %v3077, %v3076
    %v3186 = vpack.c.b16 %v3079, %v3078
    %v3187 = vpack.c.b16 %v3081, %v3080
    %v3188 = vpack.c.b16 %v3083, %v3082
    %v3189 = vpack.c.b16 %v3085, %v3084
    %v3190 = vpack.c.b16 %v3087, %v3086
    %v3191 = vpack.c.b16 %v3089, %v3088
    %v3192 = vpack.c.b16 %v3091, %v3090
    %v3193 = vpack.c.b16 %v3093, %v3092
    %v3194 = vpack.c.b16 %v3095, %v3094
    %v3195 = vpack.c.b16 %v3097, %v3096
    %v3196 = vpack.c.b16 %v3099, %v3098
    %v3197 = vpack.c.b16 %v3101, %v3100
    %v3198 = vpack.c.b16 %v3103, %v3102
    %v3199 = vpack.c.b16 %v3105, %v3104
    %v3200 = vpack.c.b16 %v3107, %v3106
    %v3201 = vpack.c.b16 %v3109, %v3108
    %v3202 = vpack.c.b16 %v3111, %v3110
    %v3203 = vpack.c.b16 %v3113, %v3112
    %v3204 = vpack.c.b16 %v3115, %v3114
    %v3205 = vpack.c.b16 %v3117, %v3116
    %v3206 = vpack.c.b16 %v3119, %v3118
    %v3207 = vpack.c.b16 %v3121, %v3120
    %v3208 = vpack.c.b16 %v3123, %v3122
    %v3209 = vpack.c.b16 %v3125, %v3124
    %v3210 = vpack.c.b16 %v3127, %v3126
    %v3211 = vpack.c.b16 %v3129, %v3128
    %v3212 = vpack.c.b16 %v3131, %v3130
    %v3213 = vpack.c.b16 %v3133, %v3132
    %v3214 = vpack.c.b16 %v3135, %v3134
    %v3215 = vpack.c.b16 %v3137, %v3136
    %v3216 = vpack.c.b16 %v3139, %v3138
    %v3217 = vpack.c.b16 %v3141, %v3140
    %v3218 = vpack.c.b16 %v3143, %v3142
    %v3219 = vpack.c.b16 %v3145, %v3144
    %v3220 = vpack.c.b16 %v3147, %v3146
    %v3221 = vpack.c.b16 %v3149, %v3148
    %v3222 = vpack.c.b16 %v3151, %v3150
    %v3223 = vpack.c.b16 %v3153, %v3152
    %v3224 = vpack.c.b16 %v3155, %v3154
    %v3225 = vpack.c.b16 %v3157, %v3156
    %v3226 = vpack.c.b16 %v3159, %v3158
    %v3227 = vpack.c.b16 %v3161, %v3160
    %v3228 = vpack.c.b16 %v3163, %v3162
    %v3229 = vpack.c.b16 %v3165, %v3164
    %3294 = vmatprep.subr.bf16.mxu0 0
    %3295 = vmatpush1.bf16.msra.mxu0 %v3166
    %3296 = vmatprep.subr.bf16.mxu0 0
    %3297 = vmatpush1.bf16.msra.mxu0 %v3167
    %3298 = vmatprep.subr.bf16.mxu0 0
    %3299 = vmatpush1.bf16.msra.mxu0 %v3168
    %3300 = vmatprep.subr.bf16.mxu0 0
    %3301 = vmatpush1.bf16.msra.mxu0 %v3169
    %3302 = vmatprep.subr.bf16.mxu0 0
    %3303 = vmatpush1.bf16.msra.mxu0 %v3170
    %3304 = vmatprep.subr.bf16.mxu0 0
    %3305 = vmatpush1.bf16.msra.mxu0 %v3171
    %3306 = vmatprep.subr.bf16.mxu0 0
    %3307 = vmatpush1.bf16.msra.mxu0 %v3172
    %3308 = vmatprep.subr.bf16.mxu0 0
    %3309 = vmatpush1.bf16.msra.mxu0 %v3173
    %3310 = vmatprep.subr.bf16.mxu0 0
    %3311 = vmatpush1.bf16.msra.mxu0 %v3174
    %3312 = vmatprep.subr.bf16.mxu0 0
    %3313 = vmatpush1.bf16.msra.mxu0 %v3175
    %3314 = vmatprep.subr.bf16.mxu0 0
    %3315 = vmatpush1.bf16.msra.mxu0 %v3176
    %3316 = vmatprep.subr.bf16.mxu0 0
    %3317 = vmatpush1.bf16.msra.mxu0 %v3177
    %3318 = vmatprep.subr.bf16.mxu0 0
    %3319 = vmatpush1.bf16.msra.mxu0 %v3178
    %3320 = vmatprep.subr.bf16.mxu0 0
    %3321 = vmatpush1.bf16.msra.mxu0 %v3179
    %3322 = vmatprep.subr.bf16.mxu0 0
    %3323 = vmatpush1.bf16.msra.mxu0 %v3180
    %3324 = vmatprep.subr.bf16.mxu0 0
    %3325 = vmatpush1.bf16.msra.mxu0 %v3181
    %3326 = vmatprep.mubr.bf16.mxu0 %v2768
    %3327 = vmatmul.mubr.bf16.gmra.mrb[0].mxu0 %v2767
    %v3328 = vpop.f32.mrb[0].mxu0
    %v3329 = vadd.f32 %v2908, %v3328
    %v3330 = vpop.f32.mrb[0].mxu0
    %v3331 = vpop.f32.mrb[0].mxu0
    %v3332 = vadd.f32 %v2908, %v3331
    %v3333 = vpop.f32.mrb[0].mxu0
    %3334 = vdwg.mxu0
    %3335 = vmatprep.subr.bf16.mxu0 0
    %3336 = vmatpush1.bf16.msra.mxu0 %v3182
    %3337 = vmatprep.subr.bf16.mxu0 0
    %3338 = vmatpush1.bf16.msra.mxu0 %v3183
    %3339 = vmatprep.subr.bf16.mxu0 0
    %3340 = vmatpush1.bf16.msra.mxu0 %v3184
    %3341 = vmatprep.subr.bf16.mxu0 0
    %3342 = vmatpush1.bf16.msra.mxu0 %v3185
    %3343 = vmatprep.subr.bf16.mxu0 0
    %3344 = vmatpush1.bf16.msra.mxu0 %v3186
    %3345 = vmatprep.subr.bf16.mxu0 0
    %3346 = vmatpush1.bf16.msra.mxu0 %v3187
    %3347 = vmatprep.subr.bf16.mxu0 0
    %3348 = vmatpush1.bf16.msra.mxu0 %v3188
    %3349 = vmatprep.subr.bf16.mxu0 0
    %3350 = vmatpush1.bf16.msra.mxu0 %v3189
    %3351 = vmatprep.subr.bf16.mxu0 0
    %3352 = vmatpush1.bf16.msra.mxu0 %v3190
    %3353 = vmatprep.subr.bf16.mxu0 0
    %3354 = vmatpush1.bf16.msra.mxu0 %v3191
    %3355 = vmatprep.subr.bf16.mxu0 0
    %3356 = vmatpush1.bf16.msra.mxu0 %v3192
    %3357 = vmatprep.subr.bf16.mxu0 0
    %3358 = vmatpush1.bf16.msra.mxu0 %v3193
    %3359 = vmatprep.subr.bf16.mxu0 0
    %3360 = vmatpush1.bf16.msra.mxu0 %v3194
    %3361 = vmatprep.subr.bf16.mxu0 0
    %3362 = vmatpush1.bf16.msra.mxu0 %v3195
    %3363 = vmatprep.subr.bf16.mxu0 0
    %3364 = vmatpush1.bf16.msra.mxu0 %v3196
    %3365 = vmatprep.subr.bf16.mxu0 0
    %3366 = vmatpush1.bf16.msra.mxu0 %v3197
    %3367 = vmatprep.mubr.bf16.mxu0 %v2770
    %3368 = vmatmul.mubr.bf16.gmra.mrb[0].mxu0 %v2769
    %v3369 = vpop.f32.mrb[0].mxu0
    %v3370 = vadd.f32 %v3329, %v3369
    %v3371 = vpop.f32.mrb[0].mxu0
    %v3372 = vpop.f32.mrb[0].mxu0
    %v3373 = vadd.f32 %v3332, %v3372
    %v3374 = vpop.f32.mrb[0].mxu0
    %3375 = vdwg.mxu0
    %3376 = vmatprep.subr.bf16.mxu0 0
    %3377 = vmatpush1.bf16.msra.mxu0 %v3198
    %3378 = vmatprep.subr.bf16.mxu0 0
    %3379 = vmatpush1.bf16.msra.mxu0 %v3199
    %3380 = vmatprep.subr.bf16.mxu0 0
    %3381 = vmatpush1.bf16.msra.mxu0 %v3200
    %3382 = vmatprep.subr.bf16.mxu0 0
    %3383 = vmatpush1.bf16.msra.mxu0 %v3201
    %3384 = vmatprep.subr.bf16.mxu0 0
    %3385 = vmatpush1.bf16.msra.mxu0 %v3202
    %3386 = vmatprep.subr.bf16.mxu0 0
    %3387 = vmatpush1.bf16.msra.mxu0 %v3203
    %3388 = vmatprep.subr.bf16.mxu0 0
    %3389 = vmatpush1.bf16.msra.mxu0 %v3204
    %3390 = vmatprep.subr.bf16.mxu0 0
    %3391 = vmatpush1.bf16.msra.mxu0 %v3205
    %3392 = vmatprep.subr.bf16.mxu0 0
    %3393 = vmatpush1.bf16.msra.mxu0 %v3206
    %3394 = vmatprep.subr.bf16.mxu0 0
    %3395 = vmatpush1.bf16.msra.mxu0 %v3207
    %3396 = vmatprep.subr.bf16.mxu0 0
    %3397 = vmatpush1.bf16.msra.mxu0 %v3208
    %3398 = vmatprep.subr.bf16.mxu0 0
    %3399 = vmatpush1.bf16.msra.mxu0 %v3209
    %3400 = vmatprep.subr.bf16.mxu0 0
    %3401 = vmatpush1.bf16.msra.mxu0 %v3210
    %3402 = vmatprep.subr.bf16.mxu0 0
    %3403 = vmatpush1.bf16.msra.mxu0 %v3211
    %3404 = vmatprep.subr.bf16.mxu0 0
    %3405 = vmatpush1.bf16.msra.mxu0 %v3212
    %3406 = vmatprep.subr.bf16.mxu0 0
    %3407 = vmatpush1.bf16.msra.mxu0 %v3213
    %3408 = vmatprep.mubr.bf16.mxu0 %v2772
    %3409 = vmatmul.mubr.bf16.gmra.mrb[0].mxu0 %v2771
    %v3410 = vpop.f32.mrb[0].mxu0
    %v3411 = vadd.f32 %v3370, %v3410
    %v3412 = vpop.f32.mrb[0].mxu0
    %v3413 = vpop.f32.mrb[0].mxu0
    %v3414 = vadd.f32 %v3373, %v3413
    %v3415 = vpop.f32.mrb[0].mxu0
    %3416 = vdwg.mxu0
    %3417 = vmatprep.subr.bf16.mxu0 0
    %3418 = vmatpush1.bf16.msra.mxu0 %v3214
    %3419 = vmatprep.subr.bf16.mxu0 0
    %3420 = vmatpush1.bf16.msra.mxu0 %v3215
    %3421 = vmatprep.subr.bf16.mxu0 0
    %3422 = vmatpush1.bf16.msra.mxu0 %v3216
    %3423 = vmatprep.subr.bf16.mxu0 0
    %3424 = vmatpush1.bf16.msra.mxu0 %v3217
    %3425 = vmatprep.subr.bf16.mxu0 0
    %3426 = vmatpush1.bf16.msra.mxu0 %v3218
    %3427 = vmatprep.subr.bf16.mxu0 0
    %3428 = vmatpush1.bf16.msra.mxu0 %v3219
    %3429 = vmatprep.subr.bf16.mxu0 0
    %3430 = vmatpush1.bf16.msra.mxu0 %v3220
    %3431 = vmatprep.subr.bf16.mxu0 0
    %3432 = vmatpush1.bf16.msra.mxu0 %v3221
    %3433 = vmatprep.subr.bf16.mxu0 0
    %3434 = vmatpush1.bf16.msra.mxu0 %v3222
    %3435 = vmatprep.subr.bf16.mxu0 0
    %3436 = vmatpush1.bf16.msra.mxu0 %v3223
    %3437 = vmatprep.subr.bf16.mxu0 0
    %3438 = vmatpush1.bf16.msra.mxu0 %v3224
    %3439 = vmatprep.subr.bf16.mxu0 0
    %3440 = vmatpush1.bf16.msra.mxu0 %v3225
    %3441 = vmatprep.subr.bf16.mxu0 0
    %3442 = vmatpush1.bf16.msra.mxu0 %v3226
    %3443 = vmatprep.subr.bf16.mxu0 0
    %3444 = vmatpush1.bf16.msra.mxu0 %v3227
    %3445 = vmatprep.subr.bf16.mxu0 0
    %3446 = vmatpush1.bf16.msra.mxu0 %v3228
    %3447 = vmatprep.subr.bf16.mxu0 0
    %3448 = vmatpush1.bf16.msra.mxu0 %v3229
    %3449 = vmatprep.mubr.bf16.mxu0 %v2774
    %3450 = vmatmul.mubr.bf16.gmra.mrb[0].mxu0 %v2773
    %v3451 = vpop.f32.mrb[0].mxu0
    %v3452 = vadd.f32 %v3411, %v3451
    %v3453 = vpop.f32.mrb[0].mxu0
    %v3454 = vpop.f32.mrb[0].mxu0
    %v3455 = vadd.f32 %v3414, %v3454
    %v3456 = vpop.f32.mrb[0].mxu0
    %3457 = vdwg.mxu0
    %v3458 = vtanh.pop %v3452
    %v3459 = vtanh.pop %v3455
    %3460 = vst [vmem:[#allocation5] sm:$0xff] %v3458
    %3461 = vst [vmem:[#allocation5 + $0x8] sm:$0xff] %v3459
    // Predicated region
    $region46: #{conditional_generator_forward.1} parent=1 // pred_check
      _
    $region47: #{conditional_generator_forward.1} parent=1 // pred_check_branch
      %3463 = sbr.rel (0) target = $region49
    $region48: #{conditional_generator_forward.1} parent=1 // pred_region
      %s3465 = ssub.s32 256, 32
      %3466 = vsyncadd [#allocation4], %s3465
      %s3467 = sshll.u32 [#allocation5], 4
      %s3468 = int_to_ptr.vmem [resolvable:$true] %s3467
      %3473 = dma.vmem_to_hbm [thread:$0]  %s3468, 32, %s10, [#allocation4], 32, 32, 2
    $region49: #{conditional_generator_forward.1} parent=1 // pred_fallthru
      _
    // Predicated region
    $region50: #{conditional_generator_forward.1} parent=1 // pred_check
      _
    $region51: #{conditional_generator_forward.1} parent=1 // pred_check_branch
      %3475 = sbr.rel (0) target = $region53
    $region52: #{conditional_generator_forward.1} parent=1 // pred_region
      %3476 = dma.done [#allocation4], 256
    $region53: #{conditional_generator_forward.1} parent=1 // pred_fallthru
      _
    %3477 = vsyncpa [#allocation3], 1
    %3478 = vsyncpa [#allocation4], 1

</llo_original>
